<compile_context>
chip_gen: v7x
topology: tpu7x:2x2x1
jax: 0.10.0
libtpu: 0.0.40
codegen_flags: <defaults>
</compile_context>

<pallas_src>
import jax
import jax.numpy as jnp
from jax.experimental import pallas as pl
from jax.experimental.pallas import tpu as pltpu

STATE_SIZE = 32      # state presented as e.g. (4, 8) per sample, flattened to 32
ACTION_SIZE = 4
H1 = 800
H2 = 600


def _round_up(x, m):
    return (x + m - 1) // m * m


H1_PAD = _round_up(H1, 128)   # 896
H2_PAD = _round_up(H2, 128)   # 640


def actor_kernel(s_ref, w1_ref, b1_ref, w2_ref, b2_ref, w3_ref, b3_ref, out_ref):
    """Whole MLP for one batch tile: 3 MXU matmuls (bf16 in, f32 acc),
    VPU ReLUs and EUP tanh in f32."""
    x = s_ref[...]                                                   # (tb, S) bf16
    h1 = jnp.dot(x, w1_ref[...], preferred_element_type=jnp.float32) + b1_ref[...]
    h1 = jnp.maximum(h1, 0.0).astype(jnp.bfloat16)                   # ReLU -> bf16 MXU input
    h2 = jnp.dot(h1, w2_ref[...], preferred_element_type=jnp.float32) + b2_ref[...]
    h2 = jnp.maximum(h2, 0.0).astype(jnp.bfloat16)                   # ReLU -> bf16 MXU input
    a = jnp.dot(h2, w3_ref[...], preferred_element_type=jnp.float32) + b3_ref[...]
    out_ref[...] = jnp.tanh(a)                                       # Tanh, f32


def actor_forward(s, params, tile_b=256):
    """s: any shape (B, ...) -> flattened to (B, state_size). Returns (B, action_size) f32."""
    w1, b1, w2, b2, w3, b3 = params
    B = s.shape[0]
    s_flat = s.reshape(B, -1).astype(jnp.bfloat16)                   # nn.Flatten + bf16 MXU feed
    S = s_flat.shape[1]
    A = w3.shape[1]
    assert S == w1.shape[0]

    # Batch tile: multiple of 8 sublanes, capped at tile_b; pad batch to a tile multiple.
    tb = min(tile_b, max(8, _round_up(B, 8)))
    Bp = _round_up(B, tb)
    if Bp != B:
        s_flat = jnp.pad(s_flat, ((0, Bp - B), (0, 0)))

    out = pl.pallas_call(
        actor_kernel,
        out_shape=jax.ShapeDtypeStruct((Bp, A), jnp.float32),
        grid=(Bp // tb,),
        in_specs=[
            pl.BlockSpec((tb, S), lambda i: (i, 0)),          # input tile (pipelined per step)
            pl.BlockSpec((S, H1_PAD), lambda i: (0, 0)),      # weights/biases: constant block
            pl.BlockSpec((1, H1_PAD), lambda i: (0, 0)),      #   index -> VMEM-resident, no
            pl.BlockSpec((H1_PAD, H2_PAD), lambda i: (0, 0)), #   re-DMA across grid steps
            pl.BlockSpec((1, H2_PAD), lambda i: (0, 0)),
            pl.BlockSpec((H2_PAD, A), lambda i: (0, 0)),
            pl.BlockSpec((1, A), lambda i: (0, 0)),
        ],
        out_specs=pl.BlockSpec((tb, A), lambda i: (i, 0)),
        compiler_params=pltpu.CompilerParams(
            dimension_semantics=("parallel",),                # megacore / v7x 2-TC sharding
        ),
    )(s_flat, w1, b1, w2, b2, w3, b3)
    # TODO(synk): for repeated tiny-batch inference, keep weights VMEM-resident across
    # calls (cross-pallas_call future pattern) instead of re-streaming them per call.
    return out[:B]


def init_actor_params(key, state_size, action_size):
    """Deterministic PyTorch-style Linear init: U(-1/sqrt(fan_in), 1/sqrt(fan_in)).
    Stored as (in, out) = W_pt.T, zero-padded to lane-aligned hidden dims,
    weights cast to bf16, biases kept f32 as (1, out) rows."""
    dims = [
        # (fan_in, fan_out, padded_in, padded_out)
        (state_size, H1, state_size, H1_PAD),
        (H1, H2, H1_PAD, H2_PAD),
        (H2, action_size, H2_PAD, action_size),
    ]
    params = []
    for fan_in, fan_out, in_pad, out_pad in dims:
        key, kw, kb = jax.random.split(key, 3)
        bound = 1.0 / jnp.sqrt(float(fan_in))
        w = jax.random.uniform(kw, (fan_in, fan_out), jnp.float32, -bound, bound)
        b = jax.random.uniform(kb, (1, fan_out), jnp.float32, -bound, bound)
        w = jnp.pad(w, ((0, in_pad - fan_in), (0, out_pad - fan_out)))
        b = jnp.pad(b, ((0, 0), (0, out_pad - fan_out)))
        params += [w.astype(jnp.bfloat16), b]
    return tuple(params)


def actor_reference(s, params):
    """Pure-JAX reference mirroring the kernel's dtype flow (bf16 MXU inputs,
    f32 accumulation, f32 elementwise)."""
    w1, b1, w2, b2, w3, b3 = params
    x = s.reshape(s.shape[0], -1).astype(jnp.bfloat16)
    h1 = jnp.maximum(jnp.dot(x, w1, preferred_element_type=jnp.float32) + b1, 0.0)
    h1 = h1.astype(jnp.bfloat16)
    h2 = jnp.maximum(jnp.dot(h1, w2, preferred_element_type=jnp.float32) + b2, 0.0)
    h2 = h2.astype(jnp.bfloat16)
    return jnp.tanh(jnp.dot(h2, w3, preferred_element_type=jnp.float32) + b3)


if __name__ == "__main__":
    key = jax.random.PRNGKey(0)
    kp, ks = jax.random.split(key)

    params = init_actor_params(kp, STATE_SIZE, ACTION_SIZE)

    # small example input: batch=2, state presented as (4, 8) and flattened to 32
    s = jax.random.normal(ks, (2, 4, 8), jnp.float32)

    out = actor_forward(s, params)
    out = jax.block_until_ready(out)

    ref = actor_reference(s, params)
    assert out.shape == (2, ACTION_SIZE)
    assert jnp.allclose(out, ref, atol=5e-3, rtol=5e-3), "mismatch vs reference"

    print("KERNEL_OK")
</pallas_src>

<mosaic_0001>
module attributes {stable_mosaic.version = 11 : i64} {
  func.func @actor_kernel(%arg0: i32, %arg1: memref<8x32xbf16, #tpu.memory_space<vmem>>, %arg2: memref<32x896xbf16, #tpu.memory_space<vmem>>, %arg3: memref<1x896xf32, #tpu.memory_space<vmem>>, %arg4: memref<896x640xbf16, #tpu.memory_space<vmem>>, %arg5: memref<1x640xf32, #tpu.memory_space<vmem>>, %arg6: memref<640x4xbf16, #tpu.memory_space<vmem>>, %arg7: memref<1x4xf32, #tpu.memory_space<vmem>>, %arg8: memref<8x4xf32, #tpu.memory_space<vmem>>) attributes {dimension_semantics = [#tpu.dimension_semantics<parallel>], iteration_bounds = array<i64: 1>, scalar_prefetch = 0 : i64, scratch_operands = 0 : i64, tpu.core_type = #tpu.core_type<tc>, window_params = [{transform_indices = @transform_0, window_bounds = array<i64: 8, 32>}, {pipeline_mode = #tpu.pipeline_mode<synchronous>, transform_indices = @transform_1, window_bounds = array<i64: 32, 896>}, {pipeline_mode = #tpu.pipeline_mode<synchronous>, transform_indices = @transform_2, window_bounds = array<i64: 1, 896>}, {pipeline_mode = #tpu.pipeline_mode<synchronous>, transform_indices = @transform_3, window_bounds = array<i64: 896, 640>}, {pipeline_mode = #tpu.pipeline_mode<synchronous>, transform_indices = @transform_4, window_bounds = array<i64: 1, 640>}, {pipeline_mode = #tpu.pipeline_mode<synchronous>, transform_indices = @transform_5, window_bounds = array<i64: 640, 4>}, {pipeline_mode = #tpu.pipeline_mode<synchronous>, transform_indices = @transform_6, window_bounds = array<i64: 1, 4>}, {transform_indices = @transform_7, window_bounds = array<i64: 8, 4>}]} {
    %c0 = arith.constant 0 : index
    %c0_0 = arith.constant 0 : index
    %0 = vector.load %arg1[%c0, %c0_0] : memref<8x32xbf16, #tpu.memory_space<vmem>>, vector<8x32xbf16>
    %c0_1 = arith.constant 0 : index
    %c0_2 = arith.constant 0 : index
    %1 = vector.load %arg2[%c0_1, %c0_2] : memref<32x896xbf16, #tpu.memory_space<vmem>>, vector<32x896xbf16>
    %cst = arith.constant dense<0.000000e+00> : vector<8x896xf32>
    %2 = tpu.matmul %0, %1, %cst {dimension_numbers = #tpu.dot_dimension_numbers<[1], [0], [0], [1], [0, 0, 1, 1], [], []>} : vector<8x32xbf16>, vector<32x896xbf16>, vector<8x896xf32> -> vector<8x896xf32>
    %c0_3 = arith.constant 0 : index
    %c0_4 = arith.constant 0 : index
    %3 = vector.load %arg3[%c0_3, %c0_4] : memref<1x896xf32, #tpu.memory_space<vmem>>, vector<1x896xf32>
    %4 = vector.broadcast %3 : vector<1x896xf32> to vector<8x896xf32>
    %5 = arith.addf %2, %4 : vector<8x896xf32>
    %cst_5 = arith.constant 0.000000e+00 : f32
    %6 = vector.broadcast %cst_5 : f32 to vector<8x896xf32>
    %7 = arith.maximumf %5, %6 : vector<8x896xf32>
    %8 = arith.truncf %7 : vector<8x896xf32> to vector<8x896xbf16>
    %c0_6 = arith.constant 0 : index
    %c0_7 = arith.constant 0 : index
    %9 = vector.load %arg4[%c0_6, %c0_7] : memref<896x640xbf16, #tpu.memory_space<vmem>>, vector<896x640xbf16>
    %cst_8 = arith.constant dense<0.000000e+00> : vector<8x640xf32>
    %10 = tpu.matmul %8, %9, %cst_8 {dimension_numbers = #tpu.dot_dimension_numbers<[1], [0], [0], [1], [0, 0, 1, 1], [], []>} : vector<8x896xbf16>, vector<896x640xbf16>, vector<8x640xf32> -> vector<8x640xf32>
    %c0_9 = arith.constant 0 : index
    %c0_10 = arith.constant 0 : index
    %11 = vector.load %arg5[%c0_9, %c0_10] : memref<1x640xf32, #tpu.memory_space<vmem>>, vector<1x640xf32>
    %12 = vector.broadcast %11 : vector<1x640xf32> to vector<8x640xf32>
    %13 = arith.addf %10, %12 : vector<8x640xf32>
    %cst_11 = arith.constant 0.000000e+00 : f32
    %14 = vector.broadcast %cst_11 : f32 to vector<8x640xf32>
    %15 = arith.maximumf %13, %14 : vector<8x640xf32>
    %16 = arith.truncf %15 : vector<8x640xf32> to vector<8x640xbf16>
    %c0_12 = arith.constant 0 : index
    %c0_13 = arith.constant 0 : index
    %17 = vector.load %arg6[%c0_12, %c0_13] : memref<640x4xbf16, #tpu.memory_space<vmem>>, vector<640x4xbf16>
    %cst_14 = arith.constant dense<0.000000e+00> : vector<8x4xf32>
    %18 = tpu.matmul %16, %17, %cst_14 {dimension_numbers = #tpu.dot_dimension_numbers<[1], [0], [0], [1], [0, 0, 1, 1], [], []>} : vector<8x640xbf16>, vector<640x4xbf16>, vector<8x4xf32> -> vector<8x4xf32>
    %c0_15 = arith.constant 0 : index
    %c0_16 = arith.constant 0 : index
    %19 = vector.load %arg7[%c0_15, %c0_16] : memref<1x4xf32, #tpu.memory_space<vmem>>, vector<1x4xf32>
    %20 = vector.broadcast %19 : vector<1x4xf32> to vector<8x4xf32>
    %21 = arith.addf %18, %20 : vector<8x4xf32>
    %22 = math.tanh %21 : vector<8x4xf32>
    %c0_17 = arith.constant 0 : index
    %c0_18 = arith.constant 0 : index
    %23 = vector.load %arg8[%c0_17, %c0_18] : memref<8x4xf32, #tpu.memory_space<vmem>>, vector<8x4xf32>
    tpu.vector_store %arg8[%c0_17, %c0_18], %22 {strides = array<i32>} : memref<8x4xf32, #tpu.memory_space<vmem>>, vector<8x4xf32>,
    return
  }
  func.func @transform_0(%arg0: i32) -> (i32, i32) {
    %c0_i32 = arith.constant 0 : i32
    %c0_i32_0 = arith.constant 0 : i32
    return %arg0, %c0_i32 : i32, i32
  }
  func.func @transform_1(%arg0: i32) -> (i32, i32) {
    %c0_i32 = arith.constant 0 : i32
    %c0_i32_0 = arith.constant 0 : i32
    %c0_i32_1 = arith.constant 0 : i32
    return %c0_i32, %c0_i32_0 : i32, i32
  }
  func.func @transform_2(%arg0: i32) -> (i32, i32) {
    %c0_i32 = arith.constant 0 : i32
    %c0_i32_0 = arith.constant 0 : i32
    %c0_i32_1 = arith.constant 0 : i32
    return %c0_i32, %c0_i32_0 : i32, i32
  }
  func.func @transform_3(%arg0: i32) -> (i32, i32) {
    %c0_i32 = arith.constant 0 : i32
    %c0_i32_0 = arith.constant 0 : i32
    %c0_i32_1 = arith.constant 0 : i32
    return %c0_i32, %c0_i32_0 : i32, i32
  }
  func.func @transform_4(%arg0: i32) -> (i32, i32) {
    %c0_i32 = arith.constant 0 : i32
    %c0_i32_0 = arith.constant 0 : i32
    %c0_i32_1 = arith.constant 0 : i32
    return %c0_i32, %c0_i32_0 : i32, i32
  }
  func.func @transform_5(%arg0: i32) -> (i32, i32) {
    %c0_i32 = arith.constant 0 : i32
    %c0_i32_0 = arith.constant 0 : i32
    %c0_i32_1 = arith.constant 0 : i32
    return %c0_i32, %c0_i32_0 : i32, i32
  }
  func.func @transform_6(%arg0: i32) -> (i32, i32) {
    %c0_i32 = arith.constant 0 : i32
    %c0_i32_0 = arith.constant 0 : i32
    %c0_i32_1 = arith.constant 0 : i32
    return %c0_i32, %c0_i32_0 : i32, i32
  }
  func.func @transform_7(%arg0: i32) -> (i32, i32) {
    %c0_i32 = arith.constant 0 : i32
    %c0_i32_0 = arith.constant 0 : i32
    return %arg0, %c0_i32 : i32, i32
  }
}

</mosaic_0001>

<llo_original>
// kernel: tpu_custom_call.1
$region0: #{tpu_custom_call.1}
  #allocation0 [shape = 'u32[]', space=smem, size = 0x4, offset = 0x4, fixed_abs, tag = 'smem constant byte address 0x4 - core index']
  #allocation1 [shape = 'u32[144,128]{1,0:T(1,128)}', space=vmem, size = 0x12000, scoped, tag = 'internal scratch']
  %s0 = inlined_call_operand.hbm [shape: bf16[8,32], index: 0, kind: input, shape index: {}]
  %s1 = inlined_call_operand.hbm [shape: bf16[32,896], index: 1, kind: input, shape index: {}]
  %s2 = inlined_call_operand.hbm [shape: f32[1,896], index: 2, kind: input, shape index: {}]
  %s3 = inlined_call_operand.hbm [shape: bf16[896,640], index: 3, kind: input, shape index: {}]
  %s4 = inlined_call_operand.hbm [shape: f32[1,640], index: 4, kind: input, shape index: {}]
  %s5 = inlined_call_operand.vmem [shape: bf16[640,4], index: 5, kind: input, shape index: {}]
  %s6 = inlined_call_operand.hbm [shape: f32[1,4], index: 6, kind: input, shape index: {}]
  %s7 = inlined_call_operand.vmem [shape: f32[8,4], index: 7, kind: output, shape index: {}]
  %s8 = sld [smem:[#allocation0]]
  $region62: #{tpu_custom_call.1} parent=0
    _
  %s10 = ssub.s32 1, %s8
  %s11 = scalar_select 0, %s10, %s8
  $region1: #{tpu_custom_call.1} parent=0
    #allocation2 [shape = 'u8[2048]{0}', space=vmem, size = 0x800, scoped, tag = 'input window, operand 0, single buffered']
    #allocation3 [shape = 's32[1]{0}', space=sflag, size = 0x4, scoped, tag = 'scoped memory for tpu_custom_call.1']
    #allocation4 [shape = 'u8[57344]{0}', space=vmem, size = 0xe000, scoped, tag = 'input window, operand 1, single buffered']
    #allocation5 [shape = 's32[1]{0}', space=sflag, size = 0x4, scoped, tag = 'scoped memory for tpu_custom_call.1']
    #allocation6 [shape = 'u8[3584]{0}', space=vmem, size = 0x1000, scoped, tag = 'input window, operand 2, single buffered']
    #allocation7 [shape = 'u8[1146880]{0}', space=vmem, size = 0x118000, scoped, tag = 'input window, operand 3, single buffered']
    #allocation8 [shape = 's32[1]{0}', space=sflag, size = 0x4, scoped, tag = 'scoped memory for tpu_custom_call.1']
    #allocation9 [shape = 'u8[2560]{0}', space=vmem, size = 0xc00, scoped, tag = 'input window, operand 4, single buffered']
    #allocation10 [shape = 'u8[512]{0}', space=vmem, size = 0x400, scoped, tag = 'input window, operand 6, single buffered']
    #allocation11 [shape = 's32[1]{0}', space=sflag, size = 0x4, scoped, tag = 'scoped memory for tpu_custom_call.1']
    %12 = vsyncpa [#allocation3], 0
    %13 = vsyncpa [#allocation5], 0
    %14 = vsyncpa [#allocation8], 0
    %15 = vsyncpa [#allocation11], 0
    // Predicated region
    $region2: #{tpu_custom_call.1} parent=1 // pred_check
      _
    $region3: #{tpu_custom_call.1} parent=1 // pred_check_branch
      %17 = sbr.rel (0) target = $region5
    $region4: #{tpu_custom_call.1} parent=1 // pred_region
      %s19 = ssub.s32 64, 64
      %20 = vsyncadd [#allocation3], %s19
      %s22 = sshll.u32 [#allocation2], 4
      %s23 = int_to_ptr.vmem [resolvable:$true] %s22
      %25 = dma.hbm_to_vmem [thread:$0]  %s0, 64, %s23, [#allocation3]
    $region5: #{tpu_custom_call.1} parent=1 // pred_fallthru
      _
    // Predicated region
    $region6: #{tpu_custom_call.1} parent=1 // pred_check
      _
    $region7: #{tpu_custom_call.1} parent=1 // pred_check_branch
      %27 = sbr.rel (0) target = $region9
    $region8: #{tpu_custom_call.1} parent=1 // pred_region
      %s29 = ssub.s32 1792, 1792
      %30 = vsyncadd [#allocation5], %s29
      %s31 = sshll.u32 [#allocation4], 4
      %s32 = int_to_ptr.vmem [resolvable:$true] %s31
      %37 = dma.hbm_to_vmem [thread:$0]  %s1, 1792, %s32, [#allocation5], 448, 448, 28
    $region9: #{tpu_custom_call.1} parent=1 // pred_fallthru
      _
    // Predicated region
    $region10: #{tpu_custom_call.1} parent=1 // pred_check
      _
    $region11: #{tpu_custom_call.1} parent=1 // pred_check_branch
      %39 = sbr.rel (0) target = $region13
    $region12: #{tpu_custom_call.1} parent=1 // pred_region
      %s41 = ssub.s32 112, 112
      %42 = vsyncadd [#allocation5], %s41
      %s44 = sshll.u32 [#allocation6], 4
      %s45 = int_to_ptr.vmem [resolvable:$true] %s44
      %47 = dma.hbm_to_vmem [thread:$0]  %s2, 112, %s45, [#allocation5]
    $region13: #{tpu_custom_call.1} parent=1 // pred_fallthru
      _
    // Predicated region
    $region14: #{tpu_custom_call.1} parent=1 // pred_check
      _
    $region15: #{tpu_custom_call.1} parent=1 // pred_check_branch
      %49 = sbr.rel (0) target = $region17
    $region16: #{tpu_custom_call.1} parent=1 // pred_region
      %s51 = ssub.s32 35840, 35840
      %52 = vsyncadd [#allocation8], %s51
      %s53 = sshll.u32 [#allocation7], 4
      %s54 = int_to_ptr.vmem [resolvable:$true] %s53
      %59 = dma.hbm_to_vmem [thread:$0]  %s3, 35840, %s54, [#allocation8], 320, 320, 20
    $region17: #{tpu_custom_call.1} parent=1 // pred_fallthru
      _
    // Predicated region
    $region18: #{tpu_custom_call.1} parent=1 // pred_check
      _
    $region19: #{tpu_custom_call.1} parent=1 // pred_check_branch
      %61 = sbr.rel (0) target = $region21
    $region20: #{tpu_custom_call.1} parent=1 // pred_region
      %s63 = ssub.s32 80, 80
      %64 = vsyncadd [#allocation8], %s63
      %s66 = sshll.u32 [#allocation9], 4
      %s67 = int_to_ptr.vmem [resolvable:$true] %s66
      %69 = dma.hbm_to_vmem [thread:$0]  %s4, 80, %s67, [#allocation8]
    $region21: #{tpu_custom_call.1} parent=1 // pred_fallthru
      _
    // Predicated region
    $region22: #{tpu_custom_call.1} parent=1 // pred_check
      _
    $region23: #{tpu_custom_call.1} parent=1 // pred_check_branch
      %71 = sbr.rel (0) target = $region25
    $region24: #{tpu_custom_call.1} parent=1 // pred_region
      _
    $region25: #{tpu_custom_call.1} parent=1 // pred_fallthru
      _
    // Predicated region
    $region26: #{tpu_custom_call.1} parent=1 // pred_check
      _
    $region27: #{tpu_custom_call.1} parent=1 // pred_check_branch
      %73 = sbr.rel (0) target = $region29
    $region28: #{tpu_custom_call.1} parent=1 // pred_region
      %s75 = ssub.s32 16, 16
      %76 = vsyncadd [#allocation11], %s75
      %s78 = sshll.u32 [#allocation10], 4
      %s79 = int_to_ptr.vmem [resolvable:$true] %s78
      %81 = dma.hbm_to_vmem [thread:$0]  %s6, 16, %s79, [#allocation11]
    $region29: #{tpu_custom_call.1} parent=1 // pred_fallthru
      _
    // Predicated region
    $region30: #{tpu_custom_call.1} parent=1 // pred_check
      _
    $region31: #{tpu_custom_call.1} parent=1 // pred_check_branch
      %83 = sbr.rel (0) target = $region33
    $region32: #{tpu_custom_call.1} parent=1 // pred_region
      %84 = dma.done [#allocation3], 64
    $region33: #{tpu_custom_call.1} parent=1 // pred_fallthru
      _
    // Predicated region
    $region34: #{tpu_custom_call.1} parent=1 // pred_check
      _
    $region35: #{tpu_custom_call.1} parent=1 // pred_check_branch
      %86 = sbr.rel (0) target = $region37
    $region36: #{tpu_custom_call.1} parent=1 // pred_region
      %87 = dma.done [#allocation5], 1792
    $region37: #{tpu_custom_call.1} parent=1 // pred_fallthru
      _
    // Predicated region
    $region38: #{tpu_custom_call.1} parent=1 // pred_check
      _
    $region39: #{tpu_custom_call.1} parent=1 // pred_check_branch
      %89 = sbr.rel (0) target = $region41
    $region40: #{tpu_custom_call.1} parent=1 // pred_region
      %90 = dma.done [#allocation5], 112
    $region41: #{tpu_custom_call.1} parent=1 // pred_fallthru
      _
    // Predicated region
    $region42: #{tpu_custom_call.1} parent=1 // pred_check
      _
    $region43: #{tpu_custom_call.1} parent=1 // pred_check_branch
      %92 = sbr.rel (0) target = $region45
    $region44: #{tpu_custom_call.1} parent=1 // pred_region
      %93 = dma.done [#allocation8], 35840
    $region45: #{tpu_custom_call.1} parent=1 // pred_fallthru
      _
    // Predicated region
    $region46: #{tpu_custom_call.1} parent=1 // pred_check
      _
    $region47: #{tpu_custom_call.1} parent=1 // pred_check_branch
      %95 = sbr.rel (0) target = $region49
    $region48: #{tpu_custom_call.1} parent=1 // pred_region
      %96 = dma.done [#allocation8], 80
    $region49: #{tpu_custom_call.1} parent=1 // pred_fallthru
      _
    // Predicated region
    $region50: #{tpu_custom_call.1} parent=1 // pred_check
      _
    $region51: #{tpu_custom_call.1} parent=1 // pred_check_branch
      %98 = sbr.rel (0) target = $region53
    $region52: #{tpu_custom_call.1} parent=1 // pred_region
      %99 = dma.done [#allocation11], 16
    $region53: #{tpu_custom_call.1} parent=1 // pred_fallthru
      _
    %v101 = vld [vmem:[#allocation2] sm:$0xf]
    %v102 = vld [vmem:[#allocation4] sm:$0xff]
    %v103 = vld [vmem:[#allocation4 + $0x8] sm:$0xff]
    %v104 = vld [vmem:[#allocation4 + $0x10] sm:$0xff]
    %v105 = vld [vmem:[#allocation4 + $0x18] sm:$0xf]
    %v106 = vld [vmem:[#allocation4 + $0x1c] sm:$0xff]
    %v107 = vld [vmem:[#allocation4 + $0x24] sm:$0xff]
    %v108 = vld [vmem:[#allocation4 + $0x2c] sm:$0xff]
    %v109 = vld [vmem:[#allocation4 + $0x34] sm:$0xf]
    %v110 = vld [vmem:[#allocation4 + $0x38] sm:$0xff]
    %v111 = vld [vmem:[#allocation4 + $0x40] sm:$0xff]
    %v112 = vld [vmem:[#allocation4 + $0x48] sm:$0xff]
    %v113 = vld [vmem:[#allocation4 + $0x50] sm:$0xf]
    %v114 = vld [vmem:[#allocation4 + $0x54] sm:$0xff]
    %v115 = vld [vmem:[#allocation4 + $0x5c] sm:$0xff]
    %v116 = vld [vmem:[#allocation4 + $0x64] sm:$0xff]
    %v117 = vld [vmem:[#allocation4 + $0x6c] sm:$0xf]
    %v118 = vld [vmem:[#allocation6] sm:$0xff]
    %v120 = vlaneseq
    %v121 = vshrl.u32 %v120, 7
    %v122 = vsub.s32 0, %v121
    %v123 = vrot.slane %v118, %v122
    %v124 = vlaneseq
    %v125 = vshrl.u32 %v124, 7
    %v126 = vsub.s32 1, %v125
    %v127 = vrot.slane %v118, %v126
    %v128 = vlaneseq
    %v129 = vshrl.u32 %v128, 7
    %v130 = vsub.s32 2, %v129
    %v131 = vrot.slane %v118, %v130
    %v132 = vlaneseq
    %v133 = vshrl.u32 %v132, 7
    %v134 = vsub.s32 3, %v133
    %v135 = vrot.slane %v118, %v134
    %v136 = vlaneseq
    %v137 = vshrl.u32 %v136, 7
    %v138 = vsub.s32 4, %v137
    %v139 = vrot.slane %v118, %v138
    %v140 = vlaneseq
    %v141 = vshrl.u32 %v140, 7
    %v142 = vsub.s32 5, %v141
    %v143 = vrot.slane %v118, %v142
    %v144 = vlaneseq
    %v145 = vshrl.u32 %v144, 7
    %v146 = vsub.s32 6, %v145
    %v147 = vrot.slane %v118, %v146
    %v171 = vunpack.c.l.b16 %v102
    %v172 = vunpack.c.h.b16 %v102
    %v173 = vunpack.c.l.b16 %v103
    %v174 = vunpack.c.h.b16 %v103
    %v175 = vunpack.c.l.b16 %v104
    %v176 = vunpack.c.h.b16 %v104
    %v177 = vunpack.c.l.b16 %v105
    %v178 = vunpack.c.l.b16 %v106
    %v179 = vunpack.c.h.b16 %v106
    %v180 = vunpack.c.l.b16 %v107
    %v181 = vunpack.c.h.b16 %v107
    %v182 = vunpack.c.l.b16 %v108
    %v183 = vunpack.c.h.b16 %v108
    %v184 = vunpack.c.l.b16 %v109
    %v185 = vunpack.c.l.b16 %v110
    %v186 = vunpack.c.h.b16 %v110
    %v187 = vunpack.c.l.b16 %v111
    %v188 = vunpack.c.h.b16 %v111
    %v189 = vunpack.c.l.b16 %v112
    %v190 = vunpack.c.h.b16 %v112
    %v191 = vunpack.c.l.b16 %v113
    %v192 = vunpack.c.l.b16 %v114
    %v193 = vunpack.c.h.b16 %v114
    %v194 = vunpack.c.l.b16 %v115
    %v195 = vunpack.c.h.b16 %v115
    %v196 = vunpack.c.l.b16 %v116
    %v197 = vunpack.c.h.b16 %v116
    %v198 = vunpack.c.l.b16 %v117
    %v199 = vpack.c.b16 %v178, %v171
    %v200 = vpack.c.b16 %v179, %v172
    %v201 = vpack.c.b16 %v180, %v173
    %v202 = vpack.c.b16 %v181, %v174
    %v203 = vpack.c.b16 %v182, %v175
    %v204 = vpack.c.b16 %v183, %v176
    %v205 = vpack.c.b16 %v184, %v177
    %v206 = vpack.c.b16 %v192, %v185
    %v207 = vpack.c.b16 %v193, %v186
    %v208 = vpack.c.b16 %v194, %v187
    %v209 = vpack.c.b16 %v195, %v188
    %v210 = vpack.c.b16 %v196, %v189
    %v211 = vpack.c.b16 %v197, %v190
    %v212 = vpack.c.b16 %v198, %v191
    %vm227 = vcmask 261120
    %v229 = vsel %vm227, %v101, 0
    %231 = vmatprep.subr.bf16.mxu0 %v200
    %232 = vmatpush1.bf16.msra.mxu0 %v199
    %233 = vmatprep.subr.bf16.mxu0 %v207
    %234 = vmatpush1.bf16.msra.mxu0 %v206
    %235 = vmatprep.subr.bf16.mxu0 0
    %236 = vmatpush1.bf16.msra.mxu0 0
    %237 = vmatprep.subr.bf16.mxu0 0
    %238 = vmatpush1.bf16.msra.mxu0 0
    %239 = vmatprep.subr.bf16.mxu0 0
    %240 = vmatpush1.bf16.msra.mxu0 0
    %241 = vmatprep.subr.bf16.mxu0 0
    %242 = vmatpush1.bf16.msra.mxu0 0
    %243 = vmatprep.subr.bf16.mxu0 0
    %244 = vmatpush1.bf16.msra.mxu0 0
    %245 = vmatprep.subr.bf16.mxu0 0
    %246 = vmatpush1.bf16.msra.mxu0 0
    %247 = vmatprep.subr.bf16.mxu0 0
    %248 = vmatpush1.bf16.msra.mxu0 0
    %249 = vmatprep.subr.bf16.mxu0 0
    %250 = vmatpush1.bf16.msra.mxu0 0
    %251 = vmatprep.subr.bf16.mxu0 0
    %252 = vmatpush1.bf16.msra.mxu0 0
    %253 = vmatprep.subr.bf16.mxu0 0
    %254 = vmatpush1.bf16.msra.mxu0 0
    %255 = vmatprep.subr.bf16.mxu0 0
    %256 = vmatpush1.bf16.msra.mxu0 0
    %257 = vmatprep.subr.bf16.mxu0 0
    %258 = vmatpush1.bf16.msra.mxu0 0
    %259 = vmatprep.subr.bf16.mxu0 0
    %260 = vmatpush1.bf16.msra.mxu0 0
    %261 = vmatprep.subr.bf16.mxu0 0
    %262 = vmatpush1.bf16.msra.mxu0 0
    %263 = vmatprep.mubr.bf16.mxu0 0
    %264 = vmatmul.mubr.bf16.gmra.mrb[0].mxu0 %v229
    %v265 = vpop.f32.mrb[0].mxu0
    %v266 = vadd.f32 %v123, %v265
    %v267 = vpop.f32.mrb[0].mxu0
    %v268 = vadd.f32 %v127, %v267
    %v269 = vpop.f32.mrb[0].mxu0
    %v270 = vpop.f32.mrb[0].mxu0
    %271 = vdwg.mxu0
    %272 = vmatprep.subr.bf16.mxu0 %v202
    %273 = vmatpush1.bf16.msra.mxu0 %v201
    %274 = vmatprep.subr.bf16.mxu0 %v209
    %275 = vmatpush1.bf16.msra.mxu0 %v208
    %276 = vmatprep.subr.bf16.mxu0 0
    %277 = vmatpush1.bf16.msra.mxu0 0
    %278 = vmatprep.subr.bf16.mxu0 0
    %279 = vmatpush1.bf16.msra.mxu0 0
    %280 = vmatprep.subr.bf16.mxu0 0
    %281 = vmatpush1.bf16.msra.mxu0 0
    %282 = vmatprep.subr.bf16.mxu0 0
    %283 = vmatpush1.bf16.msra.mxu0 0
    %284 = vmatprep.subr.bf16.mxu0 0
    %285 = vmatpush1.bf16.msra.mxu0 0
    %286 = vmatprep.subr.bf16.mxu0 0
    %287 = vmatpush1.bf16.msra.mxu0 0
    %288 = vmatprep.subr.bf16.mxu0 0
    %289 = vmatpush1.bf16.msra.mxu0 0
    %290 = vmatprep.subr.bf16.mxu0 0
    %291 = vmatpush1.bf16.msra.mxu0 0
    %292 = vmatprep.subr.bf16.mxu0 0
    %293 = vmatpush1.bf16.msra.mxu0 0
    %294 = vmatprep.subr.bf16.mxu0 0
    %295 = vmatpush1.bf16.msra.mxu0 0
    %296 = vmatprep.subr.bf16.mxu0 0
    %297 = vmatpush1.bf16.msra.mxu0 0
    %298 = vmatprep.subr.bf16.mxu0 0
    %299 = vmatpush1.bf16.msra.mxu0 0
    %300 = vmatprep.subr.bf16.mxu0 0
    %301 = vmatpush1.bf16.msra.mxu0 0
    %302 = vmatprep.subr.bf16.mxu0 0
    %303 = vmatpush1.bf16.msra.mxu0 0
    %304 = vmatprep.mubr.bf16.mxu0 0
    %305 = vmatmul.mubr.bf16.gmra.mrb[0].mxu0 %v229
    %v306 = vpop.f32.mrb[0].mxu0
    %v307 = vadd.f32 %v131, %v306
    %v308 = vpop.f32.mrb[0].mxu0
    %v309 = vadd.f32 %v135, %v308
    %v310 = vpop.f32.mrb[0].mxu0
    %v311 = vpop.f32.mrb[0].mxu0
    %312 = vdwg.mxu0
    %313 = vmatprep.subr.bf16.mxu0 %v204
    %314 = vmatpush1.bf16.msra.mxu0 %v203
    %315 = vmatprep.subr.bf16.mxu0 %v211
    %316 = vmatpush1.bf16.msra.mxu0 %v210
    %317 = vmatprep.subr.bf16.mxu0 0
    %318 = vmatpush1.bf16.msra.mxu0 0
    %319 = vmatprep.subr.bf16.mxu0 0
    %320 = vmatpush1.bf16.msra.mxu0 0
    %321 = vmatprep.subr.bf16.mxu0 0
    %322 = vmatpush1.bf16.msra.mxu0 0
    %323 = vmatprep.subr.bf16.mxu0 0
    %324 = vmatpush1.bf16.msra.mxu0 0
    %325 = vmatprep.subr.bf16.mxu0 0
    %326 = vmatpush1.bf16.msra.mxu0 0
    %327 = vmatprep.subr.bf16.mxu0 0
    %328 = vmatpush1.bf16.msra.mxu0 0
    %329 = vmatprep.subr.bf16.mxu0 0
    %330 = vmatpush1.bf16.msra.mxu0 0
    %331 = vmatprep.subr.bf16.mxu0 0
    %332 = vmatpush1.bf16.msra.mxu0 0
    %333 = vmatprep.subr.bf16.mxu0 0
    %334 = vmatpush1.bf16.msra.mxu0 0
    %335 = vmatprep.subr.bf16.mxu0 0
    %336 = vmatpush1.bf16.msra.mxu0 0
    %337 = vmatprep.subr.bf16.mxu0 0
    %338 = vmatpush1.bf16.msra.mxu0 0
    %339 = vmatprep.subr.bf16.mxu0 0
    %340 = vmatpush1.bf16.msra.mxu0 0
    %341 = vmatprep.subr.bf16.mxu0 0
    %342 = vmatpush1.bf16.msra.mxu0 0
    %343 = vmatprep.subr.bf16.mxu0 0
    %344 = vmatpush1.bf16.msra.mxu0 0
    %345 = vmatprep.mubr.bf16.mxu0 0
    %346 = vmatmul.mubr.bf16.gmra.mrb[0].mxu0 %v229
    %v347 = vpop.f32.mrb[0].mxu0
    %v348 = vadd.f32 %v139, %v347
    %v349 = vpop.f32.mrb[0].mxu0
    %v350 = vadd.f32 %v143, %v349
    %v351 = vpop.f32.mrb[0].mxu0
    %v352 = vpop.f32.mrb[0].mxu0
    %353 = vdwg.mxu0
    %354 = vmatprep.subr.bf16.mxu0 0
    %355 = vmatpush1.bf16.msra.mxu0 %v205
    %356 = vmatprep.subr.bf16.mxu0 0
    %357 = vmatpush1.bf16.msra.mxu0 %v212
    %358 = vmatprep.subr.bf16.mxu0 0
    %359 = vmatpush1.bf16.msra.mxu0 0
    %360 = vmatprep.subr.bf16.mxu0 0
    %361 = vmatpush1.bf16.msra.mxu0 0
    %362 = vmatprep.subr.bf16.mxu0 0
    %363 = vmatpush1.bf16.msra.mxu0 0
    %364 = vmatprep.subr.bf16.mxu0 0
    %365 = vmatpush1.bf16.msra.mxu0 0
    %366 = vmatprep.subr.bf16.mxu0 0
    %367 = vmatpush1.bf16.msra.mxu0 0
    %368 = vmatprep.subr.bf16.mxu0 0
    %369 = vmatpush1.bf16.msra.mxu0 0
    %370 = vmatprep.subr.bf16.mxu0 0
    %371 = vmatpush1.bf16.msra.mxu0 0
    %372 = vmatprep.subr.bf16.mxu0 0
    %373 = vmatpush1.bf16.msra.mxu0 0
    %374 = vmatprep.subr.bf16.mxu0 0
    %375 = vmatpush1.bf16.msra.mxu0 0
    %376 = vmatprep.subr.bf16.mxu0 0
    %377 = vmatpush1.bf16.msra.mxu0 0
    %378 = vmatprep.subr.bf16.mxu0 0
    %379 = vmatpush1.bf16.msra.mxu0 0
    %380 = vmatprep.subr.bf16.mxu0 0
    %381 = vmatpush1.bf16.msra.mxu0 0
    %382 = vmatprep.subr.bf16.mxu0 0
    %383 = vmatpush1.bf16.msra.mxu0 0
    %384 = vmatprep.subr.bf16.mxu0 0
    %385 = vmatpush1.bf16.msra.mxu0 0
    %386 = vmatprep.mubr.bf16.mxu0 0
    %387 = vmatmul.mubr.bf16.gmra.mrb[0].mxu0 %v229
    %v388 = vpop.f32.mrb[0].mxu0
    %v389 = vadd.f32 %v147, %v388
    %v390 = vpop.f32.mrb[0].mxu0
    %v391 = vpop.f32.mrb[0].mxu0
    %v392 = vpop.f32.mrb[0].mxu0
    %393 = vdwg.mxu0
    %v394 = vmax.f32 %v266, 0.0
    %v395 = vmax.f32 %v268, 0.0
    %v396 = vmax.f32 %v307, 0.0
    %v397 = vmax.f32 %v309, 0.0
    %v398 = vmax.f32 %v348, 0.0
    %v399 = vmax.f32 %v350, 0.0
    %v400 = vmax.f32 %v389, 0.0
    %v401 = vpack.c.bf16 %v394, %v394
    %v402 = vpack.c.bf16 %v395, %v395
    %v403 = vpack.c.bf16 %v396, %v396
    %v404 = vpack.c.bf16 %v397, %v397
    %v405 = vpack.c.bf16 %v398, %v398
    %v406 = vpack.c.bf16 %v399, %v399
    %v407 = vpack.c.bf16 %v400, %v400
    %v408 = vld [vmem:[#allocation7] sm:$0xff]
    %v409 = vld [vmem:[#allocation7 + $0x8] sm:$0xff]
    %v410 = vld [vmem:[#allocation7 + $0x10] sm:$0xf]
    %v411 = vld [vmem:[#allocation7 + $0x14] sm:$0xff]
    %v412 = vld [vmem:[#allocation7 + $0x1c] sm:$0xff]
    %v413 = vld [vmem:[#allocation7 + $0x24] sm:$0xf]
    %v414 = vld [vmem:[#allocation7 + $0x28] sm:$0xff]
    %v415 = vld [vmem:[#allocation7 + $0x30] sm:$0xff]
    %v416 = vld [vmem:[#allocation7 + $0x38] sm:$0xf]
    %v417 = vld [vmem:[#allocation7 + $0x3c] sm:$0xff]
    %v418 = vld [vmem:[#allocation7 + $0x44] sm:$0xff]
    %v419 = vld [vmem:[#allocation7 + $0x4c] sm:$0xf]
    %v420 = vld [vmem:[#allocation7 + $0x50] sm:$0xff]
    %v421 = vld [vmem:[#allocation7 + $0x58] sm:$0xff]
    %v422 = vld [vmem:[#allocation7 + $0x60] sm:$0xf]
    %v423 = vld [vmem:[#allocation7 + $0x64] sm:$0xff]
    %v424 = vld [vmem:[#allocation7 + $0x6c] sm:$0xff]
    %v425 = vld [vmem:[#allocation7 + $0x74] sm:$0xf]
    %v426 = vld [vmem:[#allocation7 + $0x78] sm:$0xff]
    %v427 = vld [vmem:[#allocation7 + $0x80] sm:$0xff]
    %v428 = vld [vmem:[#allocation7 + $0x88] sm:$0xf]
    %v429 = vld [vmem:[#allocation7 + $0x8c] sm:$0xff]
    %v430 = vld [vmem:[#allocation7 + $0x94] sm:$0xff]
    %v431 = vld [vmem:[#allocation7 + $0x9c] sm:$0xf]
    %v432 = vld [vmem:[#allocation7 + $0xa0] sm:$0xff]
    %v433 = vld [vmem:[#allocation7 + $0xa8] sm:$0xff]
    %v434 = vld [vmem:[#allocation7 + $0xb0] sm:$0xf]
    %v435 = vld [vmem:[#allocation7 + $0xb4] sm:$0xff]
    %v436 = vld [vmem:[#allocation7 + $0xbc] sm:$0xff]
    %v437 = vld [vmem:[#allocation7 + $0xc4] sm:$0xf]
    %v438 = vld [vmem:[#allocation7 + $0xc8] sm:$0xff]
    %v439 = vld [vmem:[#allocation7 + $0xd0] sm:$0xff]
    %v440 = vld [vmem:[#allocation7 + $0xd8] sm:$0xf]
    %v441 = vld [vmem:[#allocation7 + $0xdc] sm:$0xff]
    %v442 = vld [vmem:[#allocation7 + $0xe4] sm:$0xff]
    %v443 = vld [vmem:[#allocation7 + $0xec] sm:$0xf]
    %v444 = vld [vmem:[#allocation7 + $0xf0] sm:$0xff]
    %v445 = vld [vmem:[#allocation7 + $0xf8] sm:$0xff]
    %v446 = vld [vmem:[#allocation7 + $0x100] sm:$0xf]
    %v447 = vld [vmem:[#allocation7 + $0x104] sm:$0xff]
    %v448 = vld [vmem:[#allocation7 + $0x10c] sm:$0xff]
    %v449 = vld [vmem:[#allocation7 + $0x114] sm:$0xf]
    %v450 = vld [vmem:[#allocation7 + $0x118] sm:$0xff]
    %v451 = vld [vmem:[#allocation7 + $0x120] sm:$0xff]
    %v452 = vld [vmem:[#allocation7 + $0x128] sm:$0xf]
    %v453 = vld [vmem:[#allocation7 + $0x12c] sm:$0xff]
    %v454 = vld [vmem:[#allocation7 + $0x134] sm:$0xff]
    %v455 = vld [vmem:[#allocation7 + $0x13c] sm:$0xf]
    %v456 = vld [vmem:[#allocation7 + $0x140] sm:$0xff]
    %v457 = vld [vmem:[#allocation7 + $0x148] sm:$0xff]
    %v458 = vld [vmem:[#allocation7 + $0x150] sm:$0xf]
    %v459 = vld [vmem:[#allocation7 + $0x154] sm:$0xff]
    %v460 = vld [vmem:[#allocation7 + $0x15c] sm:$0xff]
    %v461 = vld [vmem:[#allocation7 + $0x164] sm:$0xf]
    %v462 = vld [vmem:[#allocation7 + $0x168] sm:$0xff]
    %v463 = vld [vmem:[#allocation7 + $0x170] sm:$0xff]
    %v464 = vld [vmem:[#allocation7 + $0x178] sm:$0xf]
    %v465 = vld [vmem:[#allocation7 + $0x17c] sm:$0xff]
    %v466 = vld [vmem:[#allocation7 + $0x184] sm:$0xff]
    %v467 = vld [vmem:[#allocation7 + $0x18c] sm:$0xf]
    %v468 = vld [vmem:[#allocation7 + $0x190] sm:$0xff]
    %v469 = vld [vmem:[#allocation7 + $0x198] sm:$0xff]
    %v470 = vld [vmem:[#allocation7 + $0x1a0] sm:$0xf]
    %v471 = vld [vmem:[#allocation7 + $0x1a4] sm:$0xff]
    %v472 = vld [vmem:[#allocation7 + $0x1ac] sm:$0xff]
    %v473 = vld [vmem:[#allocation7 + $0x1b4] sm:$0xf]
    %v474 = vld [vmem:[#allocation7 + $0x1b8] sm:$0xff]
    %v475 = vld [vmem:[#allocation7 + $0x1c0] sm:$0xff]
    %v476 = vld [vmem:[#allocation7 + $0x1c8] sm:$0xf]
    %v477 = vld [vmem:[#allocation7 + $0x1cc] sm:$0xff]
    %v478 = vld [vmem:[#allocation7 + $0x1d4] sm:$0xff]
    %v479 = vld [vmem:[#allocation7 + $0x1dc] sm:$0xf]
    %v480 = vld [vmem:[#allocation7 + $0x1e0] sm:$0xff]
    %v481 = vld [vmem:[#allocation7 + $0x1e8] sm:$0xff]
    %v482 = vld [vmem:[#allocation7 + $0x1f0] sm:$0xf]
    %v483 = vld [vmem:[#allocation7 + $0x1f4] sm:$0xff]
    %v484 = vld [vmem:[#allocation7 + $0x1fc] sm:$0xff]
    %v485 = vld [vmem:[#allocation7 + $0x204] sm:$0xf]
    %v486 = vld [vmem:[#allocation7 + $0x208] sm:$0xff]
    %v487 = vld [vmem:[#allocation7 + $0x210] sm:$0xff]
    %v488 = vld [vmem:[#allocation7 + $0x218] sm:$0xf]
    %v489 = vld [vmem:[#allocation7 + $0x21c] sm:$0xff]
    %v490 = vld [vmem:[#allocation7 + $0x224] sm:$0xff]
    %v491 = vld [vmem:[#allocation7 + $0x22c] sm:$0xf]
    %v492 = vld [vmem:[#allocation7 + $0x230] sm:$0xff]
    %v493 = vld [vmem:[#allocation7 + $0x238] sm:$0xff]
    %v494 = vld [vmem:[#allocation7 + $0x240] sm:$0xf]
    %v495 = vld [vmem:[#allocation7 + $0x244] sm:$0xff]
    %v496 = vld [vmem:[#allocation7 + $0x24c] sm:$0xff]
    %v497 = vld [vmem:[#allocation7 + $0x254] sm:$0xf]
    %v498 = vld [vmem:[#allocation7 + $0x258] sm:$0xff]
    %v499 = vld [vmem:[#allocation7 + $0x260] sm:$0xff]
    %v500 = vld [vmem:[#allocation7 + $0x268] sm:$0xf]
    %v501 = vld [vmem:[#allocation7 + $0x26c] sm:$0xff]
    %v502 = vld [vmem:[#allocation7 + $0x274] sm:$0xff]
    %v503 = vld [vmem:[#allocation7 + $0x27c] sm:$0xf]
    %v504 = vld [vmem:[#allocation7 + $0x280] sm:$0xff]
    %v505 = vld [vmem:[#allocation7 + $0x288] sm:$0xff]
    %v506 = vld [vmem:[#allocation7 + $0x290] sm:$0xf]
    %v507 = vld [vmem:[#allocation7 + $0x294] sm:$0xff]
    %v508 = vld [vmem:[#allocation7 + $0x29c] sm:$0xff]
    %v509 = vld [vmem:[#allocation7 + $0x2a4] sm:$0xf]
    %v510 = vld [vmem:[#allocation7 + $0x2a8] sm:$0xff]
    %v511 = vld [vmem:[#allocation7 + $0x2b0] sm:$0xff]
    %v512 = vld [vmem:[#allocation7 + $0x2b8] sm:$0xf]
    %v513 = vld [vmem:[#allocation7 + $0x2bc] sm:$0xff]
    %v514 = vld [vmem:[#allocation7 + $0x2c4] sm:$0xff]
    %v515 = vld [vmem:[#allocation7 + $0x2cc] sm:$0xf]
    %v516 = vld [vmem:[#allocation7 + $0x2d0] sm:$0xff]
    %v517 = vld [vmem:[#allocation7 + $0x2d8] sm:$0xff]
    %v518 = vld [vmem:[#allocation7 + $0x2e0] sm:$0xf]
    %v519 = vld [vmem:[#allocation7 + $0x2e4] sm:$0xff]
    %v520 = vld [vmem:[#allocation7 + $0x2ec] sm:$0xff]
    %v521 = vld [vmem:[#allocation7 + $0x2f4] sm:$0xf]
    %v522 = vld [vmem:[#allocation7 + $0x2f8] sm:$0xff]
    %v523 = vld [vmem:[#allocation7 + $0x300] sm:$0xff]
    %v524 = vld [vmem:[#allocation7 + $0x308] sm:$0xf]
    %v525 = vld [vmem:[#allocation7 + $0x30c] sm:$0xff]
    %v526 = vld [vmem:[#allocation7 + $0x314] sm:$0xff]
    %v527 = vld [vmem:[#allocation7 + $0x31c] sm:$0xf]
    %v528 = vld [vmem:[#allocation7 + $0x320] sm:$0xff]
    %v529 = vld [vmem:[#allocation7 + $0x328] sm:$0xff]
    %v530 = vld [vmem:[#allocation7 + $0x330] sm:$0xf]
    %v531 = vld [vmem:[#allocation7 + $0x334] sm:$0xff]
    %v532 = vld [vmem:[#allocation7 + $0x33c] sm:$0xff]
    %v533 = vld [vmem:[#allocation7 + $0x344] sm:$0xf]
    %v534 = vld [vmem:[#allocation7 + $0x348] sm:$0xff]
    %v535 = vld [vmem:[#allocation7 + $0x350] sm:$0xff]
    %v536 = vld [vmem:[#allocation7 + $0x358] sm:$0xf]
    %v537 = vld [vmem:[#allocation7 + $0x35c] sm:$0xff]
    %v538 = vld [vmem:[#allocation7 + $0x364] sm:$0xff]
    %v539 = vld [vmem:[#allocation7 + $0x36c] sm:$0xf]
    %v540 = vld [vmem:[#allocation7 + $0x370] sm:$0xff]
    %v541 = vld [vmem:[#allocation7 + $0x378] sm:$0xff]
    %v542 = vld [vmem:[#allocation7 + $0x380] sm:$0xf]
    %v543 = vld [vmem:[#allocation7 + $0x384] sm:$0xff]
    %v544 = vld [vmem:[#allocation7 + $0x38c] sm:$0xff]
    %v545 = vld [vmem:[#allocation7 + $0x394] sm:$0xf]
    %v546 = vld [vmem:[#allocation7 + $0x398] sm:$0xff]
    %v547 = vld [vmem:[#allocation7 + $0x3a0] sm:$0xff]
    %v548 = vld [vmem:[#allocation7 + $0x3a8] sm:$0xf]
    %v549 = vld [vmem:[#allocation7 + $0x3ac] sm:$0xff]
    %v550 = vld [vmem:[#allocation7 + $0x3b4] sm:$0xff]
    %v551 = vld [vmem:[#allocation7 + $0x3bc] sm:$0xf]
    %v552 = vld [vmem:[#allocation7 + $0x3c0] sm:$0xff]
    %v553 = vld [vmem:[#allocation7 + $0x3c8] sm:$0xff]
    %v554 = vld [vmem:[#allocation7 + $0x3d0] sm:$0xf]
    %v555 = vld [vmem:[#allocation7 + $0x3d4] sm:$0xff]
    %v556 = vld [vmem:[#allocation7 + $0x3dc] sm:$0xff]
    %v557 = vld [vmem:[#allocation7 + $0x3e4] sm:$0xf]
    %v558 = vld [vmem:[#allocation7 + $0x3e8] sm:$0xff]
    %v559 = vld [vmem:[#allocation7 + $0x3f0] sm:$0xff]
    %v560 = vld [vmem:[#allocation7 + $0x3f8] sm:$0xf]
    %v561 = vld [vmem:[#allocation7 + $0x3fc] sm:$0xff]
    %v562 = vld [vmem:[#allocation7 + $0x404] sm:$0xff]
    %v563 = vld [vmem:[#allocation7 + $0x40c] sm:$0xf]
    %v564 = vld [vmem:[#allocation7 + $0x410] sm:$0xff]
    %v565 = vld [vmem:[#allocation7 + $0x418] sm:$0xff]
    %v566 = vld [vmem:[#allocation7 + $0x420] sm:$0xf]
    %v567 = vld [vmem:[#allocation7 + $0x424] sm:$0xff]
    %v568 = vld [vmem:[#allocation7 + $0x42c] sm:$0xff]
    %v569 = vld [vmem:[#allocation7 + $0x434] sm:$0xf]
    %v570 = vld [vmem:[#allocation7 + $0x438] sm:$0xff]
    %v571 = vld [vmem:[#allocation7 + $0x440] sm:$0xff]
    %v572 = vld [vmem:[#allocation7 + $0x448] sm:$0xf]
    %v573 = vld [vmem:[#allocation7 + $0x44c] sm:$0xff]
    %v574 = vld [vmem:[#allocation7 + $0x454] sm:$0xff]
    %v575 = vld [vmem:[#allocation7 + $0x45c] sm:$0xf]
    %v576 = vld [vmem:[#allocation7 + $0x460] sm:$0xff]
    %v577 = vld [vmem:[#allocation7 + $0x468] sm:$0xff]
    %v578 = vld [vmem:[#allocation7 + $0x470] sm:$0xf]
    %v579 = vld [vmem:[#allocation7 + $0x474] sm:$0xff]
    %v580 = vld [vmem:[#allocation7 + $0x47c] sm:$0xff]
    %v581 = vld [vmem:[#allocation7 + $0x484] sm:$0xf]
    %v582 = vld [vmem:[#allocation7 + $0x488] sm:$0xff]
    %v583 = vld [vmem:[#allocation7 + $0x490] sm:$0xff]
    %v584 = vld [vmem:[#allocation7 + $0x498] sm:$0xf]
    %v585 = vld [vmem:[#allocation7 + $0x49c] sm:$0xff]
    %v586 = vld [vmem:[#allocation7 + $0x4a4] sm:$0xff]
    %v587 = vld [vmem:[#allocation7 + $0x4ac] sm:$0xf]
    %v588 = vld [vmem:[#allocation7 + $0x4b0] sm:$0xff]
    %v589 = vld [vmem:[#allocation7 + $0x4b8] sm:$0xff]
    %v590 = vld [vmem:[#allocation7 + $0x4c0] sm:$0xf]
    %v591 = vld [vmem:[#allocation7 + $0x4c4] sm:$0xff]
    %v592 = vld [vmem:[#allocation7 + $0x4cc] sm:$0xff]
    %v593 = vld [vmem:[#allocation7 + $0x4d4] sm:$0xf]
    %v594 = vld [vmem:[#allocation7 + $0x4d8] sm:$0xff]
    %v595 = vld [vmem:[#allocation7 + $0x4e0] sm:$0xff]
    %v596 = vld [vmem:[#allocation7 + $0x4e8] sm:$0xf]
    %v597 = vld [vmem:[#allocation7 + $0x4ec] sm:$0xff]
    %v598 = vld [vmem:[#allocation7 + $0x4f4] sm:$0xff]
    %v599 = vld [vmem:[#allocation7 + $0x4fc] sm:$0xf]
    %v600 = vld [vmem:[#allocation7 + $0x500] sm:$0xff]
    %v601 = vld [vmem:[#allocation7 + $0x508] sm:$0xff]
    %v602 = vld [vmem:[#allocation7 + $0x510] sm:$0xf]
    %v603 = vld [vmem:[#allocation7 + $0x514] sm:$0xff]
    %v604 = vld [vmem:[#allocation7 + $0x51c] sm:$0xff]
    %v605 = vld [vmem:[#allocation7 + $0x524] sm:$0xf]
    %v606 = vld [vmem:[#allocation7 + $0x528] sm:$0xff]
    %v607 = vld [vmem:[#allocation7 + $0x530] sm:$0xff]
    %v608 = vld [vmem:[#allocation7 + $0x538] sm:$0xf]
    %v609 = vld [vmem:[#allocation7 + $0x53c] sm:$0xff]
    %v610 = vld [vmem:[#allocation7 + $0x544] sm:$0xff]
    %v611 = vld [vmem:[#allocation7 + $0x54c] sm:$0xf]
    %v612 = vld [vmem:[#allocation7 + $0x550] sm:$0xff]
    %v613 = vld [vmem:[#allocation7 + $0x558] sm:$0xff]
    %v614 = vld [vmem:[#allocation7 + $0x560] sm:$0xf]
    %v615 = vld [vmem:[#allocation7 + $0x564] sm:$0xff]
    %v616 = vld [vmem:[#allocation7 + $0x56c] sm:$0xff]
    %v617 = vld [vmem:[#allocation7 + $0x574] sm:$0xf]
    %v618 = vld [vmem:[#allocation7 + $0x578] sm:$0xff]
    %v619 = vld [vmem:[#allocation7 + $0x580] sm:$0xff]
    %v620 = vld [vmem:[#allocation7 + $0x588] sm:$0xf]
    %v621 = vld [vmem:[#allocation7 + $0x58c] sm:$0xff]
    %v622 = vld [vmem:[#allocation7 + $0x594] sm:$0xff]
    %v623 = vld [vmem:[#allocation7 + $0x59c] sm:$0xf]
    %v624 = vld [vmem:[#allocation7 + $0x5a0] sm:$0xff]
    %v625 = vld [vmem:[#allocation7 + $0x5a8] sm:$0xff]
    %v626 = vld [vmem:[#allocation7 + $0x5b0] sm:$0xf]
    %v627 = vld [vmem:[#allocation7 + $0x5b4] sm:$0xff]
    %v628 = vld [vmem:[#allocation7 + $0x5bc] sm:$0xff]
    %v629 = vld [vmem:[#allocation7 + $0x5c4] sm:$0xf]
    %v630 = vld [vmem:[#allocation7 + $0x5c8] sm:$0xff]
    %v631 = vld [vmem:[#allocation7 + $0x5d0] sm:$0xff]
    %v632 = vld [vmem:[#allocation7 + $0x5d8] sm:$0xf]
    %v633 = vld [vmem:[#allocation7 + $0x5dc] sm:$0xff]
    %v634 = vld [vmem:[#allocation7 + $0x5e4] sm:$0xff]
    %v635 = vld [vmem:[#allocation7 + $0x5ec] sm:$0xf]
    %v636 = vld [vmem:[#allocation7 + $0x5f0] sm:$0xff]
    %v637 = vld [vmem:[#allocation7 + $0x5f8] sm:$0xff]
    %v638 = vld [vmem:[#allocation7 + $0x600] sm:$0xf]
    %v639 = vld [vmem:[#allocation7 + $0x604] sm:$0xff]
    %v640 = vld [vmem:[#allocation7 + $0x60c] sm:$0xff]
    %v641 = vld [vmem:[#allocation7 + $0x614] sm:$0xf]
    %v642 = vld [vmem:[#allocation7 + $0x618] sm:$0xff]
    %v643 = vld [vmem:[#allocation7 + $0x620] sm:$0xff]
    %v644 = vld [vmem:[#allocation7 + $0x628] sm:$0xf]
    %v645 = vld [vmem:[#allocation7 + $0x62c] sm:$0xff]
    %v646 = vld [vmem:[#allocation7 + $0x634] sm:$0xff]
    %v647 = vld [vmem:[#allocation7 + $0x63c] sm:$0xf]
    %v648 = vld [vmem:[#allocation7 + $0x640] sm:$0xff]
    %v649 = vld [vmem:[#allocation7 + $0x648] sm:$0xff]
    %v650 = vld [vmem:[#allocation7 + $0x650] sm:$0xf]
    %v651 = vld [vmem:[#allocation7 + $0x654] sm:$0xff]
    %v652 = vld [vmem:[#allocation7 + $0x65c] sm:$0xff]
    %v653 = vld [vmem:[#allocation7 + $0x664] sm:$0xf]
    %v654 = vld [vmem:[#allocation7 + $0x668] sm:$0xff]
    %v655 = vld [vmem:[#allocation7 + $0x670] sm:$0xff]
    %v656 = vld [vmem:[#allocation7 + $0x678] sm:$0xf]
    %v657 = vld [vmem:[#allocation7 + $0x67c] sm:$0xff]
    %v658 = vld [vmem:[#allocation7 + $0x684] sm:$0xff]
    %v659 = vld [vmem:[#allocation7 + $0x68c] sm:$0xf]
    %v660 = vld [vmem:[#allocation7 + $0x690] sm:$0xff]
    %v661 = vld [vmem:[#allocation7 + $0x698] sm:$0xff]
    %v662 = vld [vmem:[#allocation7 + $0x6a0] sm:$0xf]
    %v663 = vld [vmem:[#allocation7 + $0x6a4] sm:$0xff]
    %v664 = vld [vmem:[#allocation7 + $0x6ac] sm:$0xff]
    %v665 = vld [vmem:[#allocation7 + $0x6b4] sm:$0xf]
    %v666 = vld [vmem:[#allocation7 + $0x6b8] sm:$0xff]
    %v667 = vld [vmem:[#allocation7 + $0x6c0] sm:$0xff]
    %v668 = vld [vmem:[#allocation7 + $0x6c8] sm:$0xf]
    %v669 = vld [vmem:[#allocation7 + $0x6cc] sm:$0xff]
    %v670 = vld [vmem:[#allocation7 + $0x6d4] sm:$0xff]
    %v671 = vld [vmem:[#allocation7 + $0x6dc] sm:$0xf]
    %v672 = vld [vmem:[#allocation7 + $0x6e0] sm:$0xff]
    %v673 = vld [vmem:[#allocation7 + $0x6e8] sm:$0xff]
    %v674 = vld [vmem:[#allocation7 + $0x6f0] sm:$0xf]
    %v675 = vld [vmem:[#allocation7 + $0x6f4] sm:$0xff]
    %v676 = vld [vmem:[#allocation7 + $0x6fc] sm:$0xff]
    %v677 = vld [vmem:[#allocation7 + $0x704] sm:$0xf]
    %v678 = vld [vmem:[#allocation7 + $0x708] sm:$0xff]
    %v679 = vld [vmem:[#allocation7 + $0x710] sm:$0xff]
    %v680 = vld [vmem:[#allocation7 + $0x718] sm:$0xf]
    %v681 = vld [vmem:[#allocation7 + $0x71c] sm:$0xff]
    %v682 = vld [vmem:[#allocation7 + $0x724] sm:$0xff]
    %v683 = vld [vmem:[#allocation7 + $0x72c] sm:$0xf]
    %v684 = vld [vmem:[#allocation7 + $0x730] sm:$0xff]
    %v685 = vld [vmem:[#allocation7 + $0x738] sm:$0xff]
    %v686 = vld [vmem:[#allocation7 + $0x740] sm:$0xf]
    %v687 = vld [vmem:[#allocation7 + $0x744] sm:$0xff]
    %v688 = vld [vmem:[#allocation7 + $0x74c] sm:$0xff]
    %v689 = vld [vmem:[#allocation7 + $0x754] sm:$0xf]
    %v690 = vld [vmem:[#allocation7 + $0x758] sm:$0xff]
    %v691 = vld [vmem:[#allocation7 + $0x760] sm:$0xff]
    %v692 = vld [vmem:[#allocation7 + $0x768] sm:$0xf]
    %v693 = vld [vmem:[#allocation7 + $0x76c] sm:$0xff]
    %v694 = vld [vmem:[#allocation7 + $0x774] sm:$0xff]
    %v695 = vld [vmem:[#allocation7 + $0x77c] sm:$0xf]
    %v696 = vld [vmem:[#allocation7 + $0x780] sm:$0xff]
    %v697 = vld [vmem:[#allocation7 + $0x788] sm:$0xff]
    %v698 = vld [vmem:[#allocation7 + $0x790] sm:$0xf]
    %v699 = vld [vmem:[#allocation7 + $0x794] sm:$0xff]
    %v700 = vld [vmem:[#allocation7 + $0x79c] sm:$0xff]
    %v701 = vld [vmem:[#allocation7 + $0x7a4] sm:$0xf]
    %v702 = vld [vmem:[#allocation7 + $0x7a8] sm:$0xff]
    %v703 = vld [vmem:[#allocation7 + $0x7b0] sm:$0xff]
    %v704 = vld [vmem:[#allocation7 + $0x7b8] sm:$0xf]
    %v705 = vld [vmem:[#allocation7 + $0x7bc] sm:$0xff]
    %v706 = vld [vmem:[#allocation7 + $0x7c4] sm:$0xff]
    %v707 = vld [vmem:[#allocation7 + $0x7cc] sm:$0xf]
    %v708 = vld [vmem:[#allocation7 + $0x7d0] sm:$0xff]
    %v709 = vld [vmem:[#allocation7 + $0x7d8] sm:$0xff]
    %v710 = vld [vmem:[#allocation7 + $0x7e0] sm:$0xf]
    %v711 = vld [vmem:[#allocation7 + $0x7e4] sm:$0xff]
    %v712 = vld [vmem:[#allocation7 + $0x7ec] sm:$0xff]
    %v713 = vld [vmem:[#allocation7 + $0x7f4] sm:$0xf]
    %v714 = vld [vmem:[#allocation7 + $0x7f8] sm:$0xff]
    %v715 = vld [vmem:[#allocation7 + $0x800] sm:$0xff]
    %v716 = vld [vmem:[#allocation7 + $0x808] sm:$0xf]
    %v717 = vld [vmem:[#allocation7 + $0x80c] sm:$0xff]
    %v718 = vld [vmem:[#allocation7 + $0x814] sm:$0xff]
    %v719 = vld [vmem:[#allocation7 + $0x81c] sm:$0xf]
    %v720 = vld [vmem:[#allocation7 + $0x820] sm:$0xff]
    %v721 = vld [vmem:[#allocation7 + $0x828] sm:$0xff]
    %v722 = vld [vmem:[#allocation7 + $0x830] sm:$0xf]
    %v723 = vld [vmem:[#allocation7 + $0x834] sm:$0xff]
    %v724 = vld [vmem:[#allocation7 + $0x83c] sm:$0xff]
    %v725 = vld [vmem:[#allocation7 + $0x844] sm:$0xf]
    %v726 = vld [vmem:[#allocation7 + $0x848] sm:$0xff]
    %v727 = vld [vmem:[#allocation7 + $0x850] sm:$0xff]
    %v728 = vld [vmem:[#allocation7 + $0x858] sm:$0xf]
    %v729 = vld [vmem:[#allocation7 + $0x85c] sm:$0xff]
    %v730 = vld [vmem:[#allocation7 + $0x864] sm:$0xff]
    %v731 = vld [vmem:[#allocation7 + $0x86c] sm:$0xf]
    %v732 = vld [vmem:[#allocation7 + $0x870] sm:$0xff]
    %v733 = vld [vmem:[#allocation7 + $0x878] sm:$0xff]
    %v734 = vld [vmem:[#allocation7 + $0x880] sm:$0xf]
    %v735 = vld [vmem:[#allocation7 + $0x884] sm:$0xff]
    %v736 = vld [vmem:[#allocation7 + $0x88c] sm:$0xff]
    %v737 = vld [vmem:[#allocation7 + $0x894] sm:$0xf]
    %v738 = vld [vmem:[#allocation7 + $0x898] sm:$0xff]
    %v739 = vld [vmem:[#allocation7 + $0x8a0] sm:$0xff]
    %v740 = vld [vmem:[#allocation7 + $0x8a8] sm:$0xf]
    %v741 = vld [vmem:[#allocation7 + $0x8ac] sm:$0xff]
    %v742 = vld [vmem:[#allocation7 + $0x8b4] sm:$0xff]
    %v743 = vld [vmem:[#allocation7 + $0x8bc] sm:$0xf]
    %v744 = vld [vmem:[#allocation9] sm:$0x1f]
    %v746 = vlaneseq
    %v747 = vshrl.u32 %v746, 7
    %v748 = vsub.s32 0, %v747
    %v749 = vrot.slane %v744, %v748
    %v750 = vlaneseq
    %v751 = vshrl.u32 %v750, 7
    %v752 = vsub.s32 1, %v751
    %v753 = vrot.slane %v744, %v752
    %v754 = vlaneseq
    %v755 = vshrl.u32 %v754, 7
    %v756 = vsub.s32 2, %v755
    %v757 = vrot.slane %v744, %v756
    %v758 = vlaneseq
    %v759 = vshrl.u32 %v758, 7
    %v760 = vsub.s32 3, %v759
    %v761 = vrot.slane %v744, %v760
    %v762 = vlaneseq
    %v763 = vshrl.u32 %v762, 7
    %v764 = vsub.s32 4, %v763
    %v765 = vrot.slane %v744, %v764
    %v1107 = vunpack.c.l.b16 %v408
    %v1108 = vunpack.c.h.b16 %v408
    %v1109 = vunpack.c.l.b16 %v409
    %v1110 = vunpack.c.h.b16 %v409
    %v1111 = vunpack.c.l.b16 %v410
    %v1112 = vunpack.c.l.b16 %v411
    %v1113 = vunpack.c.h.b16 %v411
    %v1114 = vunpack.c.l.b16 %v412
    %v1115 = vunpack.c.h.b16 %v412
    %v1116 = vunpack.c.l.b16 %v413
    %v1117 = vunpack.c.l.b16 %v414
    %v1118 = vunpack.c.h.b16 %v414
    %v1119 = vunpack.c.l.b16 %v415
    %v1120 = vunpack.c.h.b16 %v415
    %v1121 = vunpack.c.l.b16 %v416
    %v1122 = vunpack.c.l.b16 %v417
    %v1123 = vunpack.c.h.b16 %v417
    %v1124 = vunpack.c.l.b16 %v418
    %v1125 = vunpack.c.h.b16 %v418
    %v1126 = vunpack.c.l.b16 %v419
    %v1127 = vunpack.c.l.b16 %v420
    %v1128 = vunpack.c.h.b16 %v420
    %v1129 = vunpack.c.l.b16 %v421
    %v1130 = vunpack.c.h.b16 %v421
    %v1131 = vunpack.c.l.b16 %v422
    %v1132 = vunpack.c.l.b16 %v423
    %v1133 = vunpack.c.h.b16 %v423
    %v1134 = vunpack.c.l.b16 %v424
    %v1135 = vunpack.c.h.b16 %v424
    %v1136 = vunpack.c.l.b16 %v425
    %v1137 = vunpack.c.l.b16 %v426
    %v1138 = vunpack.c.h.b16 %v426
    %v1139 = vunpack.c.l.b16 %v427
    %v1140 = vunpack.c.h.b16 %v427
    %v1141 = vunpack.c.l.b16 %v428
    %v1142 = vunpack.c.l.b16 %v429
    %v1143 = vunpack.c.h.b16 %v429
    %v1144 = vunpack.c.l.b16 %v430
    %v1145 = vunpack.c.h.b16 %v430
    %v1146 = vunpack.c.l.b16 %v431
    %v1147 = vunpack.c.l.b16 %v432
    %v1148 = vunpack.c.h.b16 %v432
    %v1149 = vunpack.c.l.b16 %v433
    %v1150 = vunpack.c.h.b16 %v433
    %v1151 = vunpack.c.l.b16 %v434
    %v1152 = vunpack.c.l.b16 %v435
    %v1153 = vunpack.c.h.b16 %v435
    %v1154 = vunpack.c.l.b16 %v436
    %v1155 = vunpack.c.h.b16 %v436
    %v1156 = vunpack.c.l.b16 %v437
    %v1157 = vunpack.c.l.b16 %v438
    %v1158 = vunpack.c.h.b16 %v438
    %v1159 = vunpack.c.l.b16 %v439
    %v1160 = vunpack.c.h.b16 %v439
    %v1161 = vunpack.c.l.b16 %v440
    %v1162 = vunpack.c.l.b16 %v441
    %v1163 = vunpack.c.h.b16 %v441
    %v1164 = vunpack.c.l.b16 %v442
    %v1165 = vunpack.c.h.b16 %v442
    %v1166 = vunpack.c.l.b16 %v443
    %v1167 = vunpack.c.l.b16 %v444
    %v1168 = vunpack.c.h.b16 %v444
    %v1169 = vunpack.c.l.b16 %v445
    %v1170 = vunpack.c.h.b16 %v445
    %v1171 = vunpack.c.l.b16 %v446
    %v1172 = vunpack.c.l.b16 %v447
    %v1173 = vunpack.c.h.b16 %v447
    %v1174 = vunpack.c.l.b16 %v448
    %v1175 = vunpack.c.h.b16 %v448
    %v1176 = vunpack.c.l.b16 %v449
    %v1177 = vunpack.c.l.b16 %v450
    %v1178 = vunpack.c.h.b16 %v450
    %v1179 = vunpack.c.l.b16 %v451
    %v1180 = vunpack.c.h.b16 %v451
    %v1181 = vunpack.c.l.b16 %v452
    %v1182 = vunpack.c.l.b16 %v453
    %v1183 = vunpack.c.h.b16 %v453
    %v1184 = vunpack.c.l.b16 %v454
    %v1185 = vunpack.c.h.b16 %v454
    %v1186 = vunpack.c.l.b16 %v455
    %v1187 = vunpack.c.l.b16 %v456
    %v1188 = vunpack.c.h.b16 %v456
    %v1189 = vunpack.c.l.b16 %v457
    %v1190 = vunpack.c.h.b16 %v457
    %v1191 = vunpack.c.l.b16 %v458
    %v1192 = vunpack.c.l.b16 %v459
    %v1193 = vunpack.c.h.b16 %v459
    %v1194 = vunpack.c.l.b16 %v460
    %v1195 = vunpack.c.h.b16 %v460
    %v1196 = vunpack.c.l.b16 %v461
    %v1197 = vunpack.c.l.b16 %v462
    %v1198 = vunpack.c.h.b16 %v462
    %v1199 = vunpack.c.l.b16 %v463
    %v1200 = vunpack.c.h.b16 %v463
    %v1201 = vunpack.c.l.b16 %v464
    %v1202 = vunpack.c.l.b16 %v465
    %v1203 = vunpack.c.h.b16 %v465
    %v1204 = vunpack.c.l.b16 %v466
    %v1205 = vunpack.c.h.b16 %v466
    %v1206 = vunpack.c.l.b16 %v467
    %v1207 = vunpack.c.l.b16 %v468
    %v1208 = vunpack.c.h.b16 %v468
    %v1209 = vunpack.c.l.b16 %v469
    %v1210 = vunpack.c.h.b16 %v469
    %v1211 = vunpack.c.l.b16 %v470
    %v1212 = vunpack.c.l.b16 %v471
    %v1213 = vunpack.c.h.b16 %v471
    %v1214 = vunpack.c.l.b16 %v472
    %v1215 = vunpack.c.h.b16 %v472
    %v1216 = vunpack.c.l.b16 %v473
    %v1217 = vunpack.c.l.b16 %v474
    %v1218 = vunpack.c.h.b16 %v474
    %v1219 = vunpack.c.l.b16 %v475
    %v1220 = vunpack.c.h.b16 %v475
    %v1221 = vunpack.c.l.b16 %v476
    %v1222 = vunpack.c.l.b16 %v477
    %v1223 = vunpack.c.h.b16 %v477
    %v1224 = vunpack.c.l.b16 %v478
    %v1225 = vunpack.c.h.b16 %v478
    %v1226 = vunpack.c.l.b16 %v479
    %v1227 = vunpack.c.l.b16 %v480
    %v1228 = vunpack.c.h.b16 %v480
    %v1229 = vunpack.c.l.b16 %v481
    %v1230 = vunpack.c.h.b16 %v481
    %v1231 = vunpack.c.l.b16 %v482
    %v1232 = vunpack.c.l.b16 %v483
    %v1233 = vunpack.c.h.b16 %v483
    %v1234 = vunpack.c.l.b16 %v484
    %v1235 = vunpack.c.h.b16 %v484
    %v1236 = vunpack.c.l.b16 %v485
    %v1237 = vunpack.c.l.b16 %v486
    %v1238 = vunpack.c.h.b16 %v486
    %v1239 = vunpack.c.l.b16 %v487
    %v1240 = vunpack.c.h.b16 %v487
    %v1241 = vunpack.c.l.b16 %v488
    %v1242 = vunpack.c.l.b16 %v489
    %v1243 = vunpack.c.h.b16 %v489
    %v1244 = vunpack.c.l.b16 %v490
    %v1245 = vunpack.c.h.b16 %v490
    %v1246 = vunpack.c.l.b16 %v491
    %v1247 = vunpack.c.l.b16 %v492
    %v1248 = vunpack.c.h.b16 %v492
    %v1249 = vunpack.c.l.b16 %v493
    %v1250 = vunpack.c.h.b16 %v493
    %v1251 = vunpack.c.l.b16 %v494
    %v1252 = vunpack.c.l.b16 %v495
    %v1253 = vunpack.c.h.b16 %v495
    %v1254 = vunpack.c.l.b16 %v496
    %v1255 = vunpack.c.h.b16 %v496
    %v1256 = vunpack.c.l.b16 %v497
    %v1257 = vunpack.c.l.b16 %v498
    %v1258 = vunpack.c.h.b16 %v498
    %v1259 = vunpack.c.l.b16 %v499
    %v1260 = vunpack.c.h.b16 %v499
    %v1261 = vunpack.c.l.b16 %v500
    %v1262 = vunpack.c.l.b16 %v501
    %v1263 = vunpack.c.h.b16 %v501
    %v1264 = vunpack.c.l.b16 %v502
    %v1265 = vunpack.c.h.b16 %v502
    %v1266 = vunpack.c.l.b16 %v503
    %v1267 = vunpack.c.l.b16 %v504
    %v1268 = vunpack.c.h.b16 %v504
    %v1269 = vunpack.c.l.b16 %v505
    %v1270 = vunpack.c.h.b16 %v505
    %v1271 = vunpack.c.l.b16 %v506
    %v1272 = vunpack.c.l.b16 %v507
    %v1273 = vunpack.c.h.b16 %v507
    %v1274 = vunpack.c.l.b16 %v508
    %v1275 = vunpack.c.h.b16 %v508
    %v1276 = vunpack.c.l.b16 %v509
    %v1277 = vunpack.c.l.b16 %v510
    %v1278 = vunpack.c.h.b16 %v510
    %v1279 = vunpack.c.l.b16 %v511
    %v1280 = vunpack.c.h.b16 %v511
    %v1281 = vunpack.c.l.b16 %v512
    %v1282 = vunpack.c.l.b16 %v513
    %v1283 = vunpack.c.h.b16 %v513
    %v1284 = vunpack.c.l.b16 %v514
    %v1285 = vunpack.c.h.b16 %v514
    %v1286 = vunpack.c.l.b16 %v515
    %v1287 = vunpack.c.l.b16 %v516
    %v1288 = vunpack.c.h.b16 %v516
    %v1289 = vunpack.c.l.b16 %v517
    %v1290 = vunpack.c.h.b16 %v517
    %v1291 = vunpack.c.l.b16 %v518
    %v1292 = vunpack.c.l.b16 %v519
    %v1293 = vunpack.c.h.b16 %v519
    %v1294 = vunpack.c.l.b16 %v520
    %v1295 = vunpack.c.h.b16 %v520
    %v1296 = vunpack.c.l.b16 %v521
    %v1297 = vunpack.c.l.b16 %v522
    %v1298 = vunpack.c.h.b16 %v522
    %v1299 = vunpack.c.l.b16 %v523
    %v1300 = vunpack.c.h.b16 %v523
    %v1301 = vunpack.c.l.b16 %v524
    %v1302 = vunpack.c.l.b16 %v525
    %v1303 = vunpack.c.h.b16 %v525
    %v1304 = vunpack.c.l.b16 %v526
    %v1305 = vunpack.c.h.b16 %v526
    %v1306 = vunpack.c.l.b16 %v527
    %v1307 = vunpack.c.l.b16 %v528
    %v1308 = vunpack.c.h.b16 %v528
    %v1309 = vunpack.c.l.b16 %v529
    %v1310 = vunpack.c.h.b16 %v529
    %v1311 = vunpack.c.l.b16 %v530
    %v1312 = vunpack.c.l.b16 %v531
    %v1313 = vunpack.c.h.b16 %v531
    %v1314 = vunpack.c.l.b16 %v532
    %v1315 = vunpack.c.h.b16 %v532
    %v1316 = vunpack.c.l.b16 %v533
    %v1317 = vunpack.c.l.b16 %v534
    %v1318 = vunpack.c.h.b16 %v534
    %v1319 = vunpack.c.l.b16 %v535
    %v1320 = vunpack.c.h.b16 %v535
    %v1321 = vunpack.c.l.b16 %v536
    %v1322 = vunpack.c.l.b16 %v537
    %v1323 = vunpack.c.h.b16 %v537
    %v1324 = vunpack.c.l.b16 %v538
    %v1325 = vunpack.c.h.b16 %v538
    %v1326 = vunpack.c.l.b16 %v539
    %v1327 = vunpack.c.l.b16 %v540
    %v1328 = vunpack.c.h.b16 %v540
    %v1329 = vunpack.c.l.b16 %v541
    %v1330 = vunpack.c.h.b16 %v541
    %v1331 = vunpack.c.l.b16 %v542
    %v1332 = vunpack.c.l.b16 %v543
    %v1333 = vunpack.c.h.b16 %v543
    %v1334 = vunpack.c.l.b16 %v544
    %v1335 = vunpack.c.h.b16 %v544
    %v1336 = vunpack.c.l.b16 %v545
    %v1337 = vunpack.c.l.b16 %v546
    %v1338 = vunpack.c.h.b16 %v546
    %v1339 = vunpack.c.l.b16 %v547
    %v1340 = vunpack.c.h.b16 %v547
    %v1341 = vunpack.c.l.b16 %v548
    %v1342 = vunpack.c.l.b16 %v549
    %v1343 = vunpack.c.h.b16 %v549
    %v1344 = vunpack.c.l.b16 %v550
    %v1345 = vunpack.c.h.b16 %v550
    %v1346 = vunpack.c.l.b16 %v551
    %v1347 = vunpack.c.l.b16 %v552
    %v1348 = vunpack.c.h.b16 %v552
    %v1349 = vunpack.c.l.b16 %v553
    %v1350 = vunpack.c.h.b16 %v553
    %v1351 = vunpack.c.l.b16 %v554
    %v1352 = vunpack.c.l.b16 %v555
    %v1353 = vunpack.c.h.b16 %v555
    %v1354 = vunpack.c.l.b16 %v556
    %v1355 = vunpack.c.h.b16 %v556
    %v1356 = vunpack.c.l.b16 %v557
    %v1357 = vunpack.c.l.b16 %v558
    %v1358 = vunpack.c.h.b16 %v558
    %v1359 = vunpack.c.l.b16 %v559
    %v1360 = vunpack.c.h.b16 %v559
    %v1361 = vunpack.c.l.b16 %v560
    %v1362 = vunpack.c.l.b16 %v561
    %v1363 = vunpack.c.h.b16 %v561
    %v1364 = vunpack.c.l.b16 %v562
    %v1365 = vunpack.c.h.b16 %v562
    %v1366 = vunpack.c.l.b16 %v563
    %v1367 = vunpack.c.l.b16 %v564
    %v1368 = vunpack.c.h.b16 %v564
    %v1369 = vunpack.c.l.b16 %v565
    %v1370 = vunpack.c.h.b16 %v565
    %v1371 = vunpack.c.l.b16 %v566
    %v1372 = vunpack.c.l.b16 %v567
    %v1373 = vunpack.c.h.b16 %v567
    %v1374 = vunpack.c.l.b16 %v568
    %v1375 = vunpack.c.h.b16 %v568
    %v1376 = vunpack.c.l.b16 %v569
    %v1377 = vunpack.c.l.b16 %v570
    %v1378 = vunpack.c.h.b16 %v570
    %v1379 = vunpack.c.l.b16 %v571
    %v1380 = vunpack.c.h.b16 %v571
    %v1381 = vunpack.c.l.b16 %v572
    %v1382 = vunpack.c.l.b16 %v573
    %v1383 = vunpack.c.h.b16 %v573
    %v1384 = vunpack.c.l.b16 %v574
    %v1385 = vunpack.c.h.b16 %v574
    %v1386 = vunpack.c.l.b16 %v575
    %v1387 = vunpack.c.l.b16 %v576
    %v1388 = vunpack.c.h.b16 %v576
    %v1389 = vunpack.c.l.b16 %v577
    %v1390 = vunpack.c.h.b16 %v577
    %v1391 = vunpack.c.l.b16 %v578
    %v1392 = vunpack.c.l.b16 %v579
    %v1393 = vunpack.c.h.b16 %v579
    %v1394 = vunpack.c.l.b16 %v580
    %v1395 = vunpack.c.h.b16 %v580
    %v1396 = vunpack.c.l.b16 %v581
    %v1397 = vunpack.c.l.b16 %v582
    %v1398 = vunpack.c.h.b16 %v582
    %v1399 = vunpack.c.l.b16 %v583
    %v1400 = vunpack.c.h.b16 %v583
    %v1401 = vunpack.c.l.b16 %v584
    %v1402 = vunpack.c.l.b16 %v585
    %v1403 = vunpack.c.h.b16 %v585
    %v1404 = vunpack.c.l.b16 %v586
    %v1405 = vunpack.c.h.b16 %v586
    %v1406 = vunpack.c.l.b16 %v587
    %v1407 = vunpack.c.l.b16 %v588
    %v1408 = vunpack.c.h.b16 %v588
    %v1409 = vunpack.c.l.b16 %v589
    %v1410 = vunpack.c.h.b16 %v589
    %v1411 = vunpack.c.l.b16 %v590
    %v1412 = vunpack.c.l.b16 %v591
    %v1413 = vunpack.c.h.b16 %v591
    %v1414 = vunpack.c.l.b16 %v592
    %v1415 = vunpack.c.h.b16 %v592
    %v1416 = vunpack.c.l.b16 %v593
    %v1417 = vunpack.c.l.b16 %v594
    %v1418 = vunpack.c.h.b16 %v594
    %v1419 = vunpack.c.l.b16 %v595
    %v1420 = vunpack.c.h.b16 %v595
    %v1421 = vunpack.c.l.b16 %v596
    %v1422 = vunpack.c.l.b16 %v597
    %v1423 = vunpack.c.h.b16 %v597
    %v1424 = vunpack.c.l.b16 %v598
    %v1425 = vunpack.c.h.b16 %v598
    %v1426 = vunpack.c.l.b16 %v599
    %v1427 = vunpack.c.l.b16 %v600
    %v1428 = vunpack.c.h.b16 %v600
    %v1429 = vunpack.c.l.b16 %v601
    %v1430 = vunpack.c.h.b16 %v601
    %v1431 = vunpack.c.l.b16 %v602
    %v1432 = vunpack.c.l.b16 %v603
    %v1433 = vunpack.c.h.b16 %v603
    %v1434 = vunpack.c.l.b16 %v604
    %v1435 = vunpack.c.h.b16 %v604
    %v1436 = vunpack.c.l.b16 %v605
    %v1437 = vunpack.c.l.b16 %v606
    %v1438 = vunpack.c.h.b16 %v606
    %v1439 = vunpack.c.l.b16 %v607
    %v1440 = vunpack.c.h.b16 %v607
    %v1441 = vunpack.c.l.b16 %v608
    %v1442 = vunpack.c.l.b16 %v609
    %v1443 = vunpack.c.h.b16 %v609
    %v1444 = vunpack.c.l.b16 %v610
    %v1445 = vunpack.c.h.b16 %v610
    %v1446 = vunpack.c.l.b16 %v611
    %v1447 = vunpack.c.l.b16 %v612
    %v1448 = vunpack.c.h.b16 %v612
    %v1449 = vunpack.c.l.b16 %v613
    %v1450 = vunpack.c.h.b16 %v613
    %v1451 = vunpack.c.l.b16 %v614
    %v1452 = vunpack.c.l.b16 %v615
    %v1453 = vunpack.c.h.b16 %v615
    %v1454 = vunpack.c.l.b16 %v616
    %v1455 = vunpack.c.h.b16 %v616
    %v1456 = vunpack.c.l.b16 %v617
    %v1457 = vunpack.c.l.b16 %v618
    %v1458 = vunpack.c.h.b16 %v618
    %v1459 = vunpack.c.l.b16 %v619
    %v1460 = vunpack.c.h.b16 %v619
    %v1461 = vunpack.c.l.b16 %v620
    %v1462 = vunpack.c.l.b16 %v621
    %v1463 = vunpack.c.h.b16 %v621
    %v1464 = vunpack.c.l.b16 %v622
    %v1465 = vunpack.c.h.b16 %v622
    %v1466 = vunpack.c.l.b16 %v623
    %v1467 = vunpack.c.l.b16 %v624
    %v1468 = vunpack.c.h.b16 %v624
    %v1469 = vunpack.c.l.b16 %v625
    %v1470 = vunpack.c.h.b16 %v625
    %v1471 = vunpack.c.l.b16 %v626
    %v1472 = vunpack.c.l.b16 %v627
    %v1473 = vunpack.c.h.b16 %v627
    %v1474 = vunpack.c.l.b16 %v628
    %v1475 = vunpack.c.h.b16 %v628
    %v1476 = vunpack.c.l.b16 %v629
    %v1477 = vunpack.c.l.b16 %v630
    %v1478 = vunpack.c.h.b16 %v630
    %v1479 = vunpack.c.l.b16 %v631
    %v1480 = vunpack.c.h.b16 %v631
    %v1481 = vunpack.c.l.b16 %v632
    %v1482 = vunpack.c.l.b16 %v633
    %v1483 = vunpack.c.h.b16 %v633
    %v1484 = vunpack.c.l.b16 %v634
    %v1485 = vunpack.c.h.b16 %v634
    %v1486 = vunpack.c.l.b16 %v635
    %v1487 = vunpack.c.l.b16 %v636
    %v1488 = vunpack.c.h.b16 %v636
    %v1489 = vunpack.c.l.b16 %v637
    %v1490 = vunpack.c.h.b16 %v637
    %v1491 = vunpack.c.l.b16 %v638
    %v1492 = vunpack.c.l.b16 %v639
    %v1493 = vunpack.c.h.b16 %v639
    %v1494 = vunpack.c.l.b16 %v640
    %v1495 = vunpack.c.h.b16 %v640
    %v1496 = vunpack.c.l.b16 %v641
    %v1497 = vunpack.c.l.b16 %v642
    %v1498 = vunpack.c.h.b16 %v642
    %v1499 = vunpack.c.l.b16 %v643
    %v1500 = vunpack.c.h.b16 %v643
    %v1501 = vunpack.c.l.b16 %v644
    %v1502 = vunpack.c.l.b16 %v645
    %v1503 = vunpack.c.h.b16 %v645
    %v1504 = vunpack.c.l.b16 %v646
    %v1505 = vunpack.c.h.b16 %v646
    %v1506 = vunpack.c.l.b16 %v647
    %v1507 = vunpack.c.l.b16 %v648
    %v1508 = vunpack.c.h.b16 %v648
    %v1509 = vunpack.c.l.b16 %v649
    %v1510 = vunpack.c.h.b16 %v649
    %v1511 = vunpack.c.l.b16 %v650
    %v1512 = vunpack.c.l.b16 %v651
    %v1513 = vunpack.c.h.b16 %v651
    %v1514 = vunpack.c.l.b16 %v652
    %v1515 = vunpack.c.h.b16 %v652
    %v1516 = vunpack.c.l.b16 %v653
    %v1517 = vunpack.c.l.b16 %v654
    %v1518 = vunpack.c.h.b16 %v654
    %v1519 = vunpack.c.l.b16 %v655
    %v1520 = vunpack.c.h.b16 %v655
    %v1521 = vunpack.c.l.b16 %v656
    %v1522 = vunpack.c.l.b16 %v657
    %v1523 = vunpack.c.h.b16 %v657
    %v1524 = vunpack.c.l.b16 %v658
    %v1525 = vunpack.c.h.b16 %v658
    %v1526 = vunpack.c.l.b16 %v659
    %v1527 = vunpack.c.l.b16 %v660
    %v1528 = vunpack.c.h.b16 %v660
    %v1529 = vunpack.c.l.b16 %v661
    %v1530 = vunpack.c.h.b16 %v661
    %v1531 = vunpack.c.l.b16 %v662
    %v1532 = vunpack.c.l.b16 %v663
    %v1533 = vunpack.c.h.b16 %v663
    %v1534 = vunpack.c.l.b16 %v664
    %v1535 = vunpack.c.h.b16 %v664
    %v1536 = vunpack.c.l.b16 %v665
    %v1537 = vunpack.c.l.b16 %v666
    %v1538 = vunpack.c.h.b16 %v666
    %v1539 = vunpack.c.l.b16 %v667
    %v1540 = vunpack.c.h.b16 %v667
    %v1541 = vunpack.c.l.b16 %v668
    %v1542 = vunpack.c.l.b16 %v669
    %v1543 = vunpack.c.h.b16 %v669
    %v1544 = vunpack.c.l.b16 %v670
    %v1545 = vunpack.c.h.b16 %v670
    %v1546 = vunpack.c.l.b16 %v671
    %v1547 = vunpack.c.l.b16 %v672
    %v1548 = vunpack.c.h.b16 %v672
    %v1549 = vunpack.c.l.b16 %v673
    %v1550 = vunpack.c.h.b16 %v673
    %v1551 = vunpack.c.l.b16 %v674
    %v1552 = vunpack.c.l.b16 %v675
    %v1553 = vunpack.c.h.b16 %v675
    %v1554 = vunpack.c.l.b16 %v676
    %v1555 = vunpack.c.h.b16 %v676
    %v1556 = vunpack.c.l.b16 %v677
    %v1557 = vunpack.c.l.b16 %v678
    %v1558 = vunpack.c.h.b16 %v678
    %v1559 = vunpack.c.l.b16 %v679
    %v1560 = vunpack.c.h.b16 %v679
    %v1561 = vunpack.c.l.b16 %v680
    %v1562 = vunpack.c.l.b16 %v681
    %v1563 = vunpack.c.h.b16 %v681
    %v1564 = vunpack.c.l.b16 %v682
    %v1565 = vunpack.c.h.b16 %v682
    %v1566 = vunpack.c.l.b16 %v683
    %v1567 = vunpack.c.l.b16 %v684
    %v1568 = vunpack.c.h.b16 %v684
    %v1569 = vunpack.c.l.b16 %v685
    %v1570 = vunpack.c.h.b16 %v685
    %v1571 = vunpack.c.l.b16 %v686
    %v1572 = vunpack.c.l.b16 %v687
    %v1573 = vunpack.c.h.b16 %v687
    %v1574 = vunpack.c.l.b16 %v688
    %v1575 = vunpack.c.h.b16 %v688
    %v1576 = vunpack.c.l.b16 %v689
    %v1577 = vunpack.c.l.b16 %v690
    %v1578 = vunpack.c.h.b16 %v690
    %v1579 = vunpack.c.l.b16 %v691
    %v1580 = vunpack.c.h.b16 %v691
    %v1581 = vunpack.c.l.b16 %v692
    %v1582 = vunpack.c.l.b16 %v693
    %v1583 = vunpack.c.h.b16 %v693
    %v1584 = vunpack.c.l.b16 %v694
    %v1585 = vunpack.c.h.b16 %v694
    %v1586 = vunpack.c.l.b16 %v695
    %v1587 = vunpack.c.l.b16 %v696
    %v1588 = vunpack.c.h.b16 %v696
    %v1589 = vunpack.c.l.b16 %v697
    %v1590 = vunpack.c.h.b16 %v697
    %v1591 = vunpack.c.l.b16 %v698
    %v1592 = vunpack.c.l.b16 %v699
    %v1593 = vunpack.c.h.b16 %v699
    %v1594 = vunpack.c.l.b16 %v700
    %v1595 = vunpack.c.h.b16 %v700
    %v1596 = vunpack.c.l.b16 %v701
    %v1597 = vunpack.c.l.b16 %v702
    %v1598 = vunpack.c.h.b16 %v702
    %v1599 = vunpack.c.l.b16 %v703
    %v1600 = vunpack.c.h.b16 %v703
    %v1601 = vunpack.c.l.b16 %v704
    %v1602 = vunpack.c.l.b16 %v705
    %v1603 = vunpack.c.h.b16 %v705
    %v1604 = vunpack.c.l.b16 %v706
    %v1605 = vunpack.c.h.b16 %v706
    %v1606 = vunpack.c.l.b16 %v707
    %v1607 = vunpack.c.l.b16 %v708
    %v1608 = vunpack.c.h.b16 %v708
    %v1609 = vunpack.c.l.b16 %v709
    %v1610 = vunpack.c.h.b16 %v709
    %v1611 = vunpack.c.l.b16 %v710
    %v1612 = vunpack.c.l.b16 %v711
    %v1613 = vunpack.c.h.b16 %v711
    %v1614 = vunpack.c.l.b16 %v712
    %v1615 = vunpack.c.h.b16 %v712
    %v1616 = vunpack.c.l.b16 %v713
    %v1617 = vunpack.c.l.b16 %v714
    %v1618 = vunpack.c.h.b16 %v714
    %v1619 = vunpack.c.l.b16 %v715
    %v1620 = vunpack.c.h.b16 %v715
    %v1621 = vunpack.c.l.b16 %v716
    %v1622 = vunpack.c.l.b16 %v717
    %v1623 = vunpack.c.h.b16 %v717
    %v1624 = vunpack.c.l.b16 %v718
    %v1625 = vunpack.c.h.b16 %v718
    %v1626 = vunpack.c.l.b16 %v719
    %v1627 = vunpack.c.l.b16 %v720
    %v1628 = vunpack.c.h.b16 %v720
    %v1629 = vunpack.c.l.b16 %v721
    %v1630 = vunpack.c.h.b16 %v721
    %v1631 = vunpack.c.l.b16 %v722
    %v1632 = vunpack.c.l.b16 %v723
    %v1633 = vunpack.c.h.b16 %v723
    %v1634 = vunpack.c.l.b16 %v724
    %v1635 = vunpack.c.h.b16 %v724
    %v1636 = vunpack.c.l.b16 %v725
    %v1637 = vunpack.c.l.b16 %v726
    %v1638 = vunpack.c.h.b16 %v726
    %v1639 = vunpack.c.l.b16 %v727
    %v1640 = vunpack.c.h.b16 %v727
    %v1641 = vunpack.c.l.b16 %v728
    %v1642 = vunpack.c.l.b16 %v729
    %v1643 = vunpack.c.h.b16 %v729
    %v1644 = vunpack.c.l.b16 %v730
    %v1645 = vunpack.c.h.b16 %v730
    %v1646 = vunpack.c.l.b16 %v731
    %v1647 = vunpack.c.l.b16 %v732
    %v1648 = vunpack.c.h.b16 %v732
    %v1649 = vunpack.c.l.b16 %v733
    %v1650 = vunpack.c.h.b16 %v733
    %v1651 = vunpack.c.l.b16 %v734
    %v1652 = vunpack.c.l.b16 %v735
    %v1653 = vunpack.c.h.b16 %v735
    %v1654 = vunpack.c.l.b16 %v736
    %v1655 = vunpack.c.h.b16 %v736
    %v1656 = vunpack.c.l.b16 %v737
    %v1657 = vunpack.c.l.b16 %v738
    %v1658 = vunpack.c.h.b16 %v738
    %v1659 = vunpack.c.l.b16 %v739
    %v1660 = vunpack.c.h.b16 %v739
    %v1661 = vunpack.c.l.b16 %v740
    %v1662 = vunpack.c.l.b16 %v741
    %v1663 = vunpack.c.h.b16 %v741
    %v1664 = vunpack.c.l.b16 %v742
    %v1665 = vunpack.c.h.b16 %v742
    %v1666 = vunpack.c.l.b16 %v743
    %v1667 = vpack.c.b16 %v1112, %v1107
    %v1668 = vpack.c.b16 %v1113, %v1108
    %v1669 = vpack.c.b16 %v1114, %v1109
    %v1670 = vpack.c.b16 %v1115, %v1110
    %v1671 = vpack.c.b16 %v1116, %v1111
    %v1672 = vpack.c.b16 %v1122, %v1117
    %v1673 = vpack.c.b16 %v1123, %v1118
    %v1674 = vpack.c.b16 %v1124, %v1119
    %v1675 = vpack.c.b16 %v1125, %v1120
    %v1676 = vpack.c.b16 %v1126, %v1121
    %v1677 = vpack.c.b16 %v1132, %v1127
    %v1678 = vpack.c.b16 %v1133, %v1128
    %v1679 = vpack.c.b16 %v1134, %v1129
    %v1680 = vpack.c.b16 %v1135, %v1130
    %v1681 = vpack.c.b16 %v1136, %v1131
    %v1682 = vpack.c.b16 %v1142, %v1137
    %v1683 = vpack.c.b16 %v1143, %v1138
    %v1684 = vpack.c.b16 %v1144, %v1139
    %v1685 = vpack.c.b16 %v1145, %v1140
    %v1686 = vpack.c.b16 %v1146, %v1141
    %v1687 = vpack.c.b16 %v1152, %v1147
    %v1688 = vpack.c.b16 %v1153, %v1148
    %v1689 = vpack.c.b16 %v1154, %v1149
    %v1690 = vpack.c.b16 %v1155, %v1150
    %v1691 = vpack.c.b16 %v1156, %v1151
    %v1692 = vpack.c.b16 %v1162, %v1157
    %v1693 = vpack.c.b16 %v1163, %v1158
    %v1694 = vpack.c.b16 %v1164, %v1159
    %v1695 = vpack.c.b16 %v1165, %v1160
    %v1696 = vpack.c.b16 %v1166, %v1161
    %v1697 = vpack.c.b16 %v1172, %v1167
    %v1698 = vpack.c.b16 %v1173, %v1168
    %v1699 = vpack.c.b16 %v1174, %v1169
    %v1700 = vpack.c.b16 %v1175, %v1170
    %v1701 = vpack.c.b16 %v1176, %v1171
    %v1702 = vpack.c.b16 %v1182, %v1177
    %v1703 = vpack.c.b16 %v1183, %v1178
    %v1704 = vpack.c.b16 %v1184, %v1179
    %v1705 = vpack.c.b16 %v1185, %v1180
    %v1706 = vpack.c.b16 %v1186, %v1181
    %v1707 = vpack.c.b16 %v1192, %v1187
    %v1708 = vpack.c.b16 %v1193, %v1188
    %v1709 = vpack.c.b16 %v1194, %v1189
    %v1710 = vpack.c.b16 %v1195, %v1190
    %v1711 = vpack.c.b16 %v1196, %v1191
    %v1712 = vpack.c.b16 %v1202, %v1197
    %v1713 = vpack.c.b16 %v1203, %v1198
    %v1714 = vpack.c.b16 %v1204, %v1199
    %v1715 = vpack.c.b16 %v1205, %v1200
    %v1716 = vpack.c.b16 %v1206, %v1201
    %v1717 = vpack.c.b16 %v1212, %v1207
    %v1718 = vpack.c.b16 %v1213, %v1208
    %v1719 = vpack.c.b16 %v1214, %v1209
    %v1720 = vpack.c.b16 %v1215, %v1210
    %v1721 = vpack.c.b16 %v1216, %v1211
    %v1722 = vpack.c.b16 %v1222, %v1217
    %v1723 = vpack.c.b16 %v1223, %v1218
    %v1724 = vpack.c.b16 %v1224, %v1219
    %v1725 = vpack.c.b16 %v1225, %v1220
    %v1726 = vpack.c.b16 %v1226, %v1221
    %v1727 = vpack.c.b16 %v1232, %v1227
    %v1728 = vpack.c.b16 %v1233, %v1228
    %v1729 = vpack.c.b16 %v1234, %v1229
    %v1730 = vpack.c.b16 %v1235, %v1230
    %v1731 = vpack.c.b16 %v1236, %v1231
    %v1732 = vpack.c.b16 %v1242, %v1237
    %v1733 = vpack.c.b16 %v1243, %v1238
    %v1734 = vpack.c.b16 %v1244, %v1239
    %v1735 = vpack.c.b16 %v1245, %v1240
    %v1736 = vpack.c.b16 %v1246, %v1241
    %v1737 = vpack.c.b16 %v1252, %v1247
    %v1738 = vpack.c.b16 %v1253, %v1248
    %v1739 = vpack.c.b16 %v1254, %v1249
    %v1740 = vpack.c.b16 %v1255, %v1250
    %v1741 = vpack.c.b16 %v1256, %v1251
    %v1742 = vpack.c.b16 %v1262, %v1257
    %v1743 = vpack.c.b16 %v1263, %v1258
    %v1744 = vpack.c.b16 %v1264, %v1259
    %v1745 = vpack.c.b16 %v1265, %v1260
    %v1746 = vpack.c.b16 %v1266, %v1261
    %v1747 = vpack.c.b16 %v1272, %v1267
    %v1748 = vpack.c.b16 %v1273, %v1268
    %v1749 = vpack.c.b16 %v1274, %v1269
    %v1750 = vpack.c.b16 %v1275, %v1270
    %v1751 = vpack.c.b16 %v1276, %v1271
    %v1752 = vpack.c.b16 %v1282, %v1277
    %v1753 = vpack.c.b16 %v1283, %v1278
    %v1754 = vpack.c.b16 %v1284, %v1279
    %v1755 = vpack.c.b16 %v1285, %v1280
    %v1756 = vpack.c.b16 %v1286, %v1281
    %v1757 = vpack.c.b16 %v1292, %v1287
    %v1758 = vpack.c.b16 %v1293, %v1288
    %v1759 = vpack.c.b16 %v1294, %v1289
    %v1760 = vpack.c.b16 %v1295, %v1290
    %v1761 = vpack.c.b16 %v1296, %v1291
    %v1762 = vpack.c.b16 %v1302, %v1297
    %v1763 = vpack.c.b16 %v1303, %v1298
    %v1764 = vpack.c.b16 %v1304, %v1299
    %v1765 = vpack.c.b16 %v1305, %v1300
    %v1766 = vpack.c.b16 %v1306, %v1301
    %v1767 = vpack.c.b16 %v1312, %v1307
    %v1768 = vpack.c.b16 %v1313, %v1308
    %v1769 = vpack.c.b16 %v1314, %v1309
    %v1770 = vpack.c.b16 %v1315, %v1310
    %v1771 = vpack.c.b16 %v1316, %v1311
    %v1772 = vpack.c.b16 %v1322, %v1317
    %v1773 = vpack.c.b16 %v1323, %v1318
    %v1774 = vpack.c.b16 %v1324, %v1319
    %v1775 = vpack.c.b16 %v1325, %v1320
    %v1776 = vpack.c.b16 %v1326, %v1321
    %v1777 = vpack.c.b16 %v1332, %v1327
    %v1778 = vpack.c.b16 %v1333, %v1328
    %v1779 = vpack.c.b16 %v1334, %v1329
    %v1780 = vpack.c.b16 %v1335, %v1330
    %v1781 = vpack.c.b16 %v1336, %v1331
    %v1782 = vpack.c.b16 %v1342, %v1337
    %v1783 = vpack.c.b16 %v1343, %v1338
    %v1784 = vpack.c.b16 %v1344, %v1339
    %v1785 = vpack.c.b16 %v1345, %v1340
    %v1786 = vpack.c.b16 %v1346, %v1341
    %v1787 = vpack.c.b16 %v1352, %v1347
    %v1788 = vpack.c.b16 %v1353, %v1348
    %v1789 = vpack.c.b16 %v1354, %v1349
    %v1790 = vpack.c.b16 %v1355, %v1350
    %v1791 = vpack.c.b16 %v1356, %v1351
    %v1792 = vpack.c.b16 %v1362, %v1357
    %v1793 = vpack.c.b16 %v1363, %v1358
    %v1794 = vpack.c.b16 %v1364, %v1359
    %v1795 = vpack.c.b16 %v1365, %v1360
    %v1796 = vpack.c.b16 %v1366, %v1361
    %v1797 = vpack.c.b16 %v1372, %v1367
    %v1798 = vpack.c.b16 %v1373, %v1368
    %v1799 = vpack.c.b16 %v1374, %v1369
    %v1800 = vpack.c.b16 %v1375, %v1370
    %v1801 = vpack.c.b16 %v1376, %v1371
    %v1802 = vpack.c.b16 %v1382, %v1377
    %v1803 = vpack.c.b16 %v1383, %v1378
    %v1804 = vpack.c.b16 %v1384, %v1379
    %v1805 = vpack.c.b16 %v1385, %v1380
    %v1806 = vpack.c.b16 %v1386, %v1381
    %v1807 = vpack.c.b16 %v1392, %v1387
    %v1808 = vpack.c.b16 %v1393, %v1388
    %v1809 = vpack.c.b16 %v1394, %v1389
    %v1810 = vpack.c.b16 %v1395, %v1390
    %v1811 = vpack.c.b16 %v1396, %v1391
    %v1812 = vpack.c.b16 %v1402, %v1397
    %v1813 = vpack.c.b16 %v1403, %v1398
    %v1814 = vpack.c.b16 %v1404, %v1399
    %v1815 = vpack.c.b16 %v1405, %v1400
    %v1816 = vpack.c.b16 %v1406, %v1401
    %v1817 = vpack.c.b16 %v1412, %v1407
    %v1818 = vpack.c.b16 %v1413, %v1408
    %v1819 = vpack.c.b16 %v1414, %v1409
    %v1820 = vpack.c.b16 %v1415, %v1410
    %v1821 = vpack.c.b16 %v1416, %v1411
    %v1822 = vpack.c.b16 %v1422, %v1417
    %v1823 = vpack.c.b16 %v1423, %v1418
    %v1824 = vpack.c.b16 %v1424, %v1419
    %v1825 = vpack.c.b16 %v1425, %v1420
    %v1826 = vpack.c.b16 %v1426, %v1421
    %v1827 = vpack.c.b16 %v1432, %v1427
    %v1828 = vpack.c.b16 %v1433, %v1428
    %v1829 = vpack.c.b16 %v1434, %v1429
    %v1830 = vpack.c.b16 %v1435, %v1430
    %v1831 = vpack.c.b16 %v1436, %v1431
    %v1832 = vpack.c.b16 %v1442, %v1437
    %v1833 = vpack.c.b16 %v1443, %v1438
    %v1834 = vpack.c.b16 %v1444, %v1439
    %v1835 = vpack.c.b16 %v1445, %v1440
    %v1836 = vpack.c.b16 %v1446, %v1441
    %v1837 = vpack.c.b16 %v1452, %v1447
    %v1838 = vpack.c.b16 %v1453, %v1448
    %v1839 = vpack.c.b16 %v1454, %v1449
    %v1840 = vpack.c.b16 %v1455, %v1450
    %v1841 = vpack.c.b16 %v1456, %v1451
    %v1842 = vpack.c.b16 %v1462, %v1457
    %v1843 = vpack.c.b16 %v1463, %v1458
    %v1844 = vpack.c.b16 %v1464, %v1459
    %v1845 = vpack.c.b16 %v1465, %v1460
    %v1846 = vpack.c.b16 %v1466, %v1461
    %v1847 = vpack.c.b16 %v1472, %v1467
    %v1848 = vpack.c.b16 %v1473, %v1468
    %v1849 = vpack.c.b16 %v1474, %v1469
    %v1850 = vpack.c.b16 %v1475, %v1470
    %v1851 = vpack.c.b16 %v1476, %v1471
    %v1852 = vpack.c.b16 %v1482, %v1477
    %v1853 = vpack.c.b16 %v1483, %v1478
    %v1854 = vpack.c.b16 %v1484, %v1479
    %v1855 = vpack.c.b16 %v1485, %v1480
    %v1856 = vpack.c.b16 %v1486, %v1481
    %v1857 = vpack.c.b16 %v1492, %v1487
    %v1858 = vpack.c.b16 %v1493, %v1488
    %v1859 = vpack.c.b16 %v1494, %v1489
    %v1860 = vpack.c.b16 %v1495, %v1490
    %v1861 = vpack.c.b16 %v1496, %v1491
    %v1862 = vpack.c.b16 %v1502, %v1497
    %v1863 = vpack.c.b16 %v1503, %v1498
    %v1864 = vpack.c.b16 %v1504, %v1499
    %v1865 = vpack.c.b16 %v1505, %v1500
    %v1866 = vpack.c.b16 %v1506, %v1501
    %v1867 = vpack.c.b16 %v1512, %v1507
    %v1868 = vpack.c.b16 %v1513, %v1508
    %v1869 = vpack.c.b16 %v1514, %v1509
    %v1870 = vpack.c.b16 %v1515, %v1510
    %v1871 = vpack.c.b16 %v1516, %v1511
    %v1872 = vpack.c.b16 %v1522, %v1517
    %v1873 = vpack.c.b16 %v1523, %v1518
    %v1874 = vpack.c.b16 %v1524, %v1519
    %v1875 = vpack.c.b16 %v1525, %v1520
    %v1876 = vpack.c.b16 %v1526, %v1521
    %v1877 = vpack.c.b16 %v1532, %v1527
    %v1878 = vpack.c.b16 %v1533, %v1528
    %v1879 = vpack.c.b16 %v1534, %v1529
    %v1880 = vpack.c.b16 %v1535, %v1530
    %v1881 = vpack.c.b16 %v1536, %v1531
    %v1882 = vpack.c.b16 %v1542, %v1537
    %v1883 = vpack.c.b16 %v1543, %v1538
    %v1884 = vpack.c.b16 %v1544, %v1539
    %v1885 = vpack.c.b16 %v1545, %v1540
    %v1886 = vpack.c.b16 %v1546, %v1541
    %v1887 = vpack.c.b16 %v1552, %v1547
    %v1888 = vpack.c.b16 %v1553, %v1548
    %v1889 = vpack.c.b16 %v1554, %v1549
    %v1890 = vpack.c.b16 %v1555, %v1550
    %v1891 = vpack.c.b16 %v1556, %v1551
    %v1892 = vpack.c.b16 %v1562, %v1557
    %v1893 = vpack.c.b16 %v1563, %v1558
    %v1894 = vpack.c.b16 %v1564, %v1559
    %v1895 = vpack.c.b16 %v1565, %v1560
    %v1896 = vpack.c.b16 %v1566, %v1561
    %v1897 = vpack.c.b16 %v1572, %v1567
    %v1898 = vpack.c.b16 %v1573, %v1568
    %v1899 = vpack.c.b16 %v1574, %v1569
    %v1900 = vpack.c.b16 %v1575, %v1570
    %v1901 = vpack.c.b16 %v1576, %v1571
    %v1902 = vpack.c.b16 %v1582, %v1577
    %v1903 = vpack.c.b16 %v1583, %v1578
    %v1904 = vpack.c.b16 %v1584, %v1579
    %v1905 = vpack.c.b16 %v1585, %v1580
    %v1906 = vpack.c.b16 %v1586, %v1581
    %v1907 = vpack.c.b16 %v1592, %v1587
    %v1908 = vpack.c.b16 %v1593, %v1588
    %v1909 = vpack.c.b16 %v1594, %v1589
    %v1910 = vpack.c.b16 %v1595, %v1590
    %v1911 = vpack.c.b16 %v1596, %v1591
    %v1912 = vpack.c.b16 %v1602, %v1597
    %v1913 = vpack.c.b16 %v1603, %v1598
    %v1914 = vpack.c.b16 %v1604, %v1599
    %v1915 = vpack.c.b16 %v1605, %v1600
    %v1916 = vpack.c.b16 %v1606, %v1601
    %v1917 = vpack.c.b16 %v1612, %v1607
    %v1918 = vpack.c.b16 %v1613, %v1608
    %v1919 = vpack.c.b16 %v1614, %v1609
    %v1920 = vpack.c.b16 %v1615, %v1610
    %v1921 = vpack.c.b16 %v1616, %v1611
    %v1922 = vpack.c.b16 %v1622, %v1617
    %v1923 = vpack.c.b16 %v1623, %v1618
    %v1924 = vpack.c.b16 %v1624, %v1619
    %v1925 = vpack.c.b16 %v1625, %v1620
    %v1926 = vpack.c.b16 %v1626, %v1621
    %v1927 = vpack.c.b16 %v1632, %v1627
    %v1928 = vpack.c.b16 %v1633, %v1628
    %v1929 = vpack.c.b16 %v1634, %v1629
    %v1930 = vpack.c.b16 %v1635, %v1630
    %v1931 = vpack.c.b16 %v1636, %v1631
    %v1932 = vpack.c.b16 %v1642, %v1637
    %v1933 = vpack.c.b16 %v1643, %v1638
    %v1934 = vpack.c.b16 %v1644, %v1639
    %v1935 = vpack.c.b16 %v1645, %v1640
    %v1936 = vpack.c.b16 %v1646, %v1641
    %v1937 = vpack.c.b16 %v1652, %v1647
    %v1938 = vpack.c.b16 %v1653, %v1648
    %v1939 = vpack.c.b16 %v1654, %v1649
    %v1940 = vpack.c.b16 %v1655, %v1650
    %v1941 = vpack.c.b16 %v1656, %v1651
    %v1942 = vpack.c.b16 %v1662, %v1657
    %v1943 = vpack.c.b16 %v1663, %v1658
    %v1944 = vpack.c.b16 %v1664, %v1659
    %v1945 = vpack.c.b16 %v1665, %v1660
    %v1946 = vpack.c.b16 %v1666, %v1661
    %2227 = vmatprep.subr.bf16.mxu0 %v1668
    %2228 = vmatpush1.bf16.msra.mxu0 %v1667
    %2229 = vmatprep.subr.bf16.mxu0 %v1673
    %2230 = vmatpush1.bf16.msra.mxu0 %v1672
    %2231 = vmatprep.subr.bf16.mxu0 %v1678
    %2232 = vmatpush1.bf16.msra.mxu0 %v1677
    %2233 = vmatprep.subr.bf16.mxu0 %v1683
    %2234 = vmatpush1.bf16.msra.mxu0 %v1682
    %2235 = vmatprep.subr.bf16.mxu0 %v1688
    %2236 = vmatpush1.bf16.msra.mxu0 %v1687
    %2237 = vmatprep.subr.bf16.mxu0 %v1693
    %2238 = vmatpush1.bf16.msra.mxu0 %v1692
    %2239 = vmatprep.subr.bf16.mxu0 %v1698
    %2240 = vmatpush1.bf16.msra.mxu0 %v1697
    %2241 = vmatprep.subr.bf16.mxu0 %v1703
    %2242 = vmatpush1.bf16.msra.mxu0 %v1702
    %2243 = vmatprep.subr.bf16.mxu0 %v1708
    %2244 = vmatpush1.bf16.msra.mxu0 %v1707
    %2245 = vmatprep.subr.bf16.mxu0 %v1713
    %2246 = vmatpush1.bf16.msra.mxu0 %v1712
    %2247 = vmatprep.subr.bf16.mxu0 %v1718
    %2248 = vmatpush1.bf16.msra.mxu0 %v1717
    %2249 = vmatprep.subr.bf16.mxu0 %v1723
    %2250 = vmatpush1.bf16.msra.mxu0 %v1722
    %2251 = vmatprep.subr.bf16.mxu0 %v1728
    %2252 = vmatpush1.bf16.msra.mxu0 %v1727
    %2253 = vmatprep.subr.bf16.mxu0 %v1733
    %2254 = vmatpush1.bf16.msra.mxu0 %v1732
    %2255 = vmatprep.subr.bf16.mxu0 %v1738
    %2256 = vmatpush1.bf16.msra.mxu0 %v1737
    %2257 = vmatprep.subr.bf16.mxu0 %v1743
    %2258 = vmatpush1.bf16.msra.mxu0 %v1742
    %2259 = vmatprep.mubr.bf16.mxu0 %v402
    %2260 = vmatmul.mubr.bf16.gmra.mrb[0].mxu0 %v401
    %v2261 = vpop.f32.mrb[0].mxu0
    %v2262 = vadd.f32 %v749, %v2261
    %v2263 = vpop.f32.mrb[0].mxu0
    %v2264 = vadd.f32 %v753, %v2263
    %v2265 = vpop.f32.mrb[0].mxu0
    %v2266 = vpop.f32.mrb[0].mxu0
    %2267 = vdwg.mxu0
    %2268 = vmatprep.subr.bf16.mxu0 %v1748
    %2269 = vmatpush1.bf16.msra.mxu0 %v1747
    %2270 = vmatprep.subr.bf16.mxu0 %v1753
    %2271 = vmatpush1.bf16.msra.mxu0 %v1752
    %2272 = vmatprep.subr.bf16.mxu0 %v1758
    %2273 = vmatpush1.bf16.msra.mxu0 %v1757
    %2274 = vmatprep.subr.bf16.mxu0 %v1763
    %2275 = vmatpush1.bf16.msra.mxu0 %v1762
    %2276 = vmatprep.subr.bf16.mxu0 %v1768
    %2277 = vmatpush1.bf16.msra.mxu0 %v1767
    %2278 = vmatprep.subr.bf16.mxu0 %v1773
    %2279 = vmatpush1.bf16.msra.mxu0 %v1772
    %2280 = vmatprep.subr.bf16.mxu0 %v1778
    %2281 = vmatpush1.bf16.msra.mxu0 %v1777
    %2282 = vmatprep.subr.bf16.mxu0 %v1783
    %2283 = vmatpush1.bf16.msra.mxu0 %v1782
    %2284 = vmatprep.subr.bf16.mxu0 %v1788
    %2285 = vmatpush1.bf16.msra.mxu0 %v1787
    %2286 = vmatprep.subr.bf16.mxu0 %v1793
    %2287 = vmatpush1.bf16.msra.mxu0 %v1792
    %2288 = vmatprep.subr.bf16.mxu0 %v1798
    %2289 = vmatpush1.bf16.msra.mxu0 %v1797
    %2290 = vmatprep.subr.bf16.mxu0 %v1803
    %2291 = vmatpush1.bf16.msra.mxu0 %v1802
    %2292 = vmatprep.subr.bf16.mxu0 %v1808
    %2293 = vmatpush1.bf16.msra.mxu0 %v1807
    %2294 = vmatprep.subr.bf16.mxu0 %v1813
    %2295 = vmatpush1.bf16.msra.mxu0 %v1812
    %2296 = vmatprep.subr.bf16.mxu0 %v1818
    %2297 = vmatpush1.bf16.msra.mxu0 %v1817
    %2298 = vmatprep.subr.bf16.mxu0 %v1823
    %2299 = vmatpush1.bf16.msra.mxu0 %v1822
    %2300 = vmatprep.mubr.bf16.mxu0 %v404
    %2301 = vmatmul.mubr.bf16.gmra.mrb[0].mxu0 %v403
    %v2302 = vpop.f32.mrb[0].mxu0
    %v2303 = vadd.f32 %v2262, %v2302
    %v2304 = vpop.f32.mrb[0].mxu0
    %v2305 = vadd.f32 %v2264, %v2304
    %v2306 = vpop.f32.mrb[0].mxu0
    %v2307 = vpop.f32.mrb[0].mxu0
    %2308 = vdwg.mxu0
    %2309 = vmatprep.subr.bf16.mxu0 %v1828
    %2310 = vmatpush1.bf16.msra.mxu0 %v1827
    %2311 = vmatprep.subr.bf16.mxu0 %v1833
    %2312 = vmatpush1.bf16.msra.mxu0 %v1832
    %2313 = vmatprep.subr.bf16.mxu0 %v1838
    %2314 = vmatpush1.bf16.msra.mxu0 %v1837
    %2315 = vmatprep.subr.bf16.mxu0 %v1843
    %2316 = vmatpush1.bf16.msra.mxu0 %v1842
    %2317 = vmatprep.subr.bf16.mxu0 %v1848
    %2318 = vmatpush1.bf16.msra.mxu0 %v1847
    %2319 = vmatprep.subr.bf16.mxu0 %v1853
    %2320 = vmatpush1.bf16.msra.mxu0 %v1852
    %2321 = vmatprep.subr.bf16.mxu0 %v1858
    %2322 = vmatpush1.bf16.msra.mxu0 %v1857
    %2323 = vmatprep.subr.bf16.mxu0 %v1863
    %2324 = vmatpush1.bf16.msra.mxu0 %v1862
    %2325 = vmatprep.subr.bf16.mxu0 %v1868
    %2326 = vmatpush1.bf16.msra.mxu0 %v1867
    %2327 = vmatprep.subr.bf16.mxu0 %v1873
    %2328 = vmatpush1.bf16.msra.mxu0 %v1872
    %2329 = vmatprep.subr.bf16.mxu0 %v1878
    %2330 = vmatpush1.bf16.msra.mxu0 %v1877
    %2331 = vmatprep.subr.bf16.mxu0 %v1883
    %2332 = vmatpush1.bf16.msra.mxu0 %v1882
    %2333 = vmatprep.subr.bf16.mxu0 %v1888
    %2334 = vmatpush1.bf16.msra.mxu0 %v1887
    %2335 = vmatprep.subr.bf16.mxu0 %v1893
    %2336 = vmatpush1.bf16.msra.mxu0 %v1892
    %2337 = vmatprep.subr.bf16.mxu0 %v1898
    %2338 = vmatpush1.bf16.msra.mxu0 %v1897
    %2339 = vmatprep.subr.bf16.mxu0 %v1903
    %2340 = vmatpush1.bf16.msra.mxu0 %v1902
    %2341 = vmatprep.mubr.bf16.mxu0 %v406
    %2342 = vmatmul.mubr.bf16.gmra.mrb[0].mxu0 %v405
    %v2343 = vpop.f32.mrb[0].mxu0
    %v2344 = vadd.f32 %v2303, %v2343
    %v2345 = vpop.f32.mrb[0].mxu0
    %v2346 = vadd.f32 %v2305, %v2345
    %v2347 = vpop.f32.mrb[0].mxu0
    %v2348 = vpop.f32.mrb[0].mxu0
    %2349 = vdwg.mxu0
    %2350 = vmatprep.subr.bf16.mxu0 %v1908
    %2351 = vmatpush1.bf16.msra.mxu0 %v1907
    %2352 = vmatprep.subr.bf16.mxu0 %v1913
    %2353 = vmatpush1.bf16.msra.mxu0 %v1912
    %2354 = vmatprep.subr.bf16.mxu0 %v1918
    %2355 = vmatpush1.bf16.msra.mxu0 %v1917
    %2356 = vmatprep.subr.bf16.mxu0 %v1923
    %2357 = vmatpush1.bf16.msra.mxu0 %v1922
    %2358 = vmatprep.subr.bf16.mxu0 %v1928
    %2359 = vmatpush1.bf16.msra.mxu0 %v1927
    %2360 = vmatprep.subr.bf16.mxu0 %v1933
    %2361 = vmatpush1.bf16.msra.mxu0 %v1932
    %2362 = vmatprep.subr.bf16.mxu0 %v1938
    %2363 = vmatpush1.bf16.msra.mxu0 %v1937
    %2364 = vmatprep.subr.bf16.mxu0 %v1943
    %2365 = vmatpush1.bf16.msra.mxu0 %v1942
    %2366 = vmatprep.subr.bf16.mxu0 0
    %2367 = vmatpush1.bf16.msra.mxu0 0
    %2368 = vmatprep.subr.bf16.mxu0 0
    %2369 = vmatpush1.bf16.msra.mxu0 0
    %2370 = vmatprep.subr.bf16.mxu0 0
    %2371 = vmatpush1.bf16.msra.mxu0 0
    %2372 = vmatprep.subr.bf16.mxu0 0
    %2373 = vmatpush1.bf16.msra.mxu0 0
    %2374 = vmatprep.subr.bf16.mxu0 0
    %2375 = vmatpush1.bf16.msra.mxu0 0
    %2376 = vmatprep.subr.bf16.mxu0 0
    %2377 = vmatpush1.bf16.msra.mxu0 0
    %2378 = vmatprep.subr.bf16.mxu0 0
    %2379 = vmatpush1.bf16.msra.mxu0 0
    %2380 = vmatprep.subr.bf16.mxu0 0
    %2381 = vmatpush1.bf16.msra.mxu0 0
    %2382 = vmatprep.mubr.bf16.mxu0 0
    %2383 = vmatmul.mubr.bf16.gmra.mrb[0].mxu0 %v407
    %v2384 = vpop.f32.mrb[0].mxu0
    %v2385 = vadd.f32 %v2344, %v2384
    %v2386 = vpop.f32.mrb[0].mxu0
    %v2387 = vadd.f32 %v2346, %v2386
    %v2388 = vpop.f32.mrb[0].mxu0
    %v2389 = vpop.f32.mrb[0].mxu0
    %2390 = vdwg.mxu0
    %2391 = vmatprep.subr.bf16.mxu0 %v1670
    %2392 = vmatpush1.bf16.msra.mxu0 %v1669
    %2393 = vmatprep.subr.bf16.mxu0 %v1675
    %2394 = vmatpush1.bf16.msra.mxu0 %v1674
    %2395 = vmatprep.subr.bf16.mxu0 %v1680
    %2396 = vmatpush1.bf16.msra.mxu0 %v1679
    %2397 = vmatprep.subr.bf16.mxu0 %v1685
    %2398 = vmatpush1.bf16.msra.mxu0 %v1684
    %2399 = vmatprep.subr.bf16.mxu0 %v1690
    %2400 = vmatpush1.bf16.msra.mxu0 %v1689
    %2401 = vmatprep.subr.bf16.mxu0 %v1695
    %2402 = vmatpush1.bf16.msra.mxu0 %v1694
    %2403 = vmatprep.subr.bf16.mxu0 %v1700
    %2404 = vmatpush1.bf16.msra.mxu0 %v1699
    %2405 = vmatprep.subr.bf16.mxu0 %v1705
    %2406 = vmatpush1.bf16.msra.mxu0 %v1704
    %2407 = vmatprep.subr.bf16.mxu0 %v1710
    %2408 = vmatpush1.bf16.msra.mxu0 %v1709
    %2409 = vmatprep.subr.bf16.mxu0 %v1715
    %2410 = vmatpush1.bf16.msra.mxu0 %v1714
    %2411 = vmatprep.subr.bf16.mxu0 %v1720
    %2412 = vmatpush1.bf16.msra.mxu0 %v1719
    %2413 = vmatprep.subr.bf16.mxu0 %v1725
    %2414 = vmatpush1.bf16.msra.mxu0 %v1724
    %2415 = vmatprep.subr.bf16.mxu0 %v1730
    %2416 = vmatpush1.bf16.msra.mxu0 %v1729
    %2417 = vmatprep.subr.bf16.mxu0 %v1735
    %2418 = vmatpush1.bf16.msra.mxu0 %v1734
    %2419 = vmatprep.subr.bf16.mxu0 %v1740
    %2420 = vmatpush1.bf16.msra.mxu0 %v1739
    %2421 = vmatprep.subr.bf16.mxu0 %v1745
    %2422 = vmatpush1.bf16.msra.mxu0 %v1744
    %2423 = vmatprep.mubr.bf16.mxu0 %v402
    %2424 = vmatmul.mubr.bf16.gmra.mrb[0].mxu0 %v401
    %v2425 = vpop.f32.mrb[0].mxu0
    %v2426 = vadd.f32 %v757, %v2425
    %v2427 = vpop.f32.mrb[0].mxu0
    %v2428 = vadd.f32 %v761, %v2427
    %v2429 = vpop.f32.mrb[0].mxu0
    %v2430 = vpop.f32.mrb[0].mxu0
    %2431 = vdwg.mxu0
    %2432 = vmatprep.subr.bf16.mxu0 %v1750
    %2433 = vmatpush1.bf16.msra.mxu0 %v1749
    %2434 = vmatprep.subr.bf16.mxu0 %v1755
    %2435 = vmatpush1.bf16.msra.mxu0 %v1754
    %2436 = vmatprep.subr.bf16.mxu0 %v1760
    %2437 = vmatpush1.bf16.msra.mxu0 %v1759
    %2438 = vmatprep.subr.bf16.mxu0 %v1765
    %2439 = vmatpush1.bf16.msra.mxu0 %v1764
    %2440 = vmatprep.subr.bf16.mxu0 %v1770
    %2441 = vmatpush1.bf16.msra.mxu0 %v1769
    %2442 = vmatprep.subr.bf16.mxu0 %v1775
    %2443 = vmatpush1.bf16.msra.mxu0 %v1774
    %2444 = vmatprep.subr.bf16.mxu0 %v1780
    %2445 = vmatpush1.bf16.msra.mxu0 %v1779
    %2446 = vmatprep.subr.bf16.mxu0 %v1785
    %2447 = vmatpush1.bf16.msra.mxu0 %v1784
    %2448 = vmatprep.subr.bf16.mxu0 %v1790
    %2449 = vmatpush1.bf16.msra.mxu0 %v1789
    %2450 = vmatprep.subr.bf16.mxu0 %v1795
    %2451 = vmatpush1.bf16.msra.mxu0 %v1794
    %2452 = vmatprep.subr.bf16.mxu0 %v1800
    %2453 = vmatpush1.bf16.msra.mxu0 %v1799
    %2454 = vmatprep.subr.bf16.mxu0 %v1805
    %2455 = vmatpush1.bf16.msra.mxu0 %v1804
    %2456 = vmatprep.subr.bf16.mxu0 %v1810
    %2457 = vmatpush1.bf16.msra.mxu0 %v1809
    %2458 = vmatprep.subr.bf16.mxu0 %v1815
    %2459 = vmatpush1.bf16.msra.mxu0 %v1814
    %2460 = vmatprep.subr.bf16.mxu0 %v1820
    %2461 = vmatpush1.bf16.msra.mxu0 %v1819
    %2462 = vmatprep.subr.bf16.mxu0 %v1825
    %2463 = vmatpush1.bf16.msra.mxu0 %v1824
    %2464 = vmatprep.mubr.bf16.mxu0 %v404
    %2465 = vmatmul.mubr.bf16.gmra.mrb[0].mxu0 %v403
    %v2466 = vpop.f32.mrb[0].mxu0
    %v2467 = vadd.f32 %v2426, %v2466
    %v2468 = vpop.f32.mrb[0].mxu0
    %v2469 = vadd.f32 %v2428, %v2468
    %v2470 = vpop.f32.mrb[0].mxu0
    %v2471 = vpop.f32.mrb[0].mxu0
    %2472 = vdwg.mxu0
    %2473 = vmatprep.subr.bf16.mxu0 %v1830
    %2474 = vmatpush1.bf16.msra.mxu0 %v1829
    %2475 = vmatprep.subr.bf16.mxu0 %v1835
    %2476 = vmatpush1.bf16.msra.mxu0 %v1834
    %2477 = vmatprep.subr.bf16.mxu0 %v1840
    %2478 = vmatpush1.bf16.msra.mxu0 %v1839
    %2479 = vmatprep.subr.bf16.mxu0 %v1845
    %2480 = vmatpush1.bf16.msra.mxu0 %v1844
    %2481 = vmatprep.subr.bf16.mxu0 %v1850
    %2482 = vmatpush1.bf16.msra.mxu0 %v1849
    %2483 = vmatprep.subr.bf16.mxu0 %v1855
    %2484 = vmatpush1.bf16.msra.mxu0 %v1854
    %2485 = vmatprep.subr.bf16.mxu0 %v1860
    %2486 = vmatpush1.bf16.msra.mxu0 %v1859
    %2487 = vmatprep.subr.bf16.mxu0 %v1865
    %2488 = vmatpush1.bf16.msra.mxu0 %v1864
    %2489 = vmatprep.subr.bf16.mxu0 %v1870
    %2490 = vmatpush1.bf16.msra.mxu0 %v1869
    %2491 = vmatprep.subr.bf16.mxu0 %v1875
    %2492 = vmatpush1.bf16.msra.mxu0 %v1874
    %2493 = vmatprep.subr.bf16.mxu0 %v1880
    %2494 = vmatpush1.bf16.msra.mxu0 %v1879
    %2495 = vmatprep.subr.bf16.mxu0 %v1885
    %2496 = vmatpush1.bf16.msra.mxu0 %v1884
    %2497 = vmatprep.subr.bf16.mxu0 %v1890
    %2498 = vmatpush1.bf16.msra.mxu0 %v1889
    %2499 = vmatprep.subr.bf16.mxu0 %v1895
    %2500 = vmatpush1.bf16.msra.mxu0 %v1894
    %2501 = vmatprep.subr.bf16.mxu0 %v1900
    %2502 = vmatpush1.bf16.msra.mxu0 %v1899
    %2503 = vmatprep.subr.bf16.mxu0 %v1905
    %2504 = vmatpush1.bf16.msra.mxu0 %v1904
    %2505 = vmatprep.mubr.bf16.mxu0 %v406
    %2506 = vmatmul.mubr.bf16.gmra.mrb[0].mxu0 %v405
    %v2507 = vpop.f32.mrb[0].mxu0
    %v2508 = vadd.f32 %v2467, %v2507
    %v2509 = vpop.f32.mrb[0].mxu0
    %v2510 = vadd.f32 %v2469, %v2509
    %v2511 = vpop.f32.mrb[0].mxu0
    %v2512 = vpop.f32.mrb[0].mxu0
    %2513 = vdwg.mxu0
    %2514 = vmatprep.subr.bf16.mxu0 %v1910
    %2515 = vmatpush1.bf16.msra.mxu0 %v1909
    %2516 = vmatprep.subr.bf16.mxu0 %v1915
    %2517 = vmatpush1.bf16.msra.mxu0 %v1914
    %2518 = vmatprep.subr.bf16.mxu0 %v1920
    %2519 = vmatpush1.bf16.msra.mxu0 %v1919
    %2520 = vmatprep.subr.bf16.mxu0 %v1925
    %2521 = vmatpush1.bf16.msra.mxu0 %v1924
    %2522 = vmatprep.subr.bf16.mxu0 %v1930
    %2523 = vmatpush1.bf16.msra.mxu0 %v1929
    %2524 = vmatprep.subr.bf16.mxu0 %v1935
    %2525 = vmatpush1.bf16.msra.mxu0 %v1934
    %2526 = vmatprep.subr.bf16.mxu0 %v1940
    %2527 = vmatpush1.bf16.msra.mxu0 %v1939
    %2528 = vmatprep.subr.bf16.mxu0 %v1945
    %2529 = vmatpush1.bf16.msra.mxu0 %v1944
    %2530 = vmatprep.subr.bf16.mxu0 0
    %2531 = vmatpush1.bf16.msra.mxu0 0
    %2532 = vmatprep.subr.bf16.mxu0 0
    %2533 = vmatpush1.bf16.msra.mxu0 0
    %2534 = vmatprep.subr.bf16.mxu0 0
    %2535 = vmatpush1.bf16.msra.mxu0 0
    %2536 = vmatprep.subr.bf16.mxu0 0
    %2537 = vmatpush1.bf16.msra.mxu0 0
    %2538 = vmatprep.subr.bf16.mxu0 0
    %2539 = vmatpush1.bf16.msra.mxu0 0
    %2540 = vmatprep.subr.bf16.mxu0 0
    %2541 = vmatpush1.bf16.msra.mxu0 0
    %2542 = vmatprep.subr.bf16.mxu0 0
    %2543 = vmatpush1.bf16.msra.mxu0 0
    %2544 = vmatprep.subr.bf16.mxu0 0
    %2545 = vmatpush1.bf16.msra.mxu0 0
    %2546 = vmatprep.mubr.bf16.mxu0 0
    %2547 = vmatmul.mubr.bf16.gmra.mrb[0].mxu0 %v407
    %v2548 = vpop.f32.mrb[0].mxu0
    %v2549 = vadd.f32 %v2508, %v2548
    %v2550 = vpop.f32.mrb[0].mxu0
    %v2551 = vadd.f32 %v2510, %v2550
    %v2552 = vpop.f32.mrb[0].mxu0
    %v2553 = vpop.f32.mrb[0].mxu0
    %2554 = vdwg.mxu0
    %2555 = vmatprep.subr.bf16.mxu0 0
    %2556 = vmatpush1.bf16.msra.mxu0 %v1671
    %2557 = vmatprep.subr.bf16.mxu0 0
    %2558 = vmatpush1.bf16.msra.mxu0 %v1676
    %2559 = vmatprep.subr.bf16.mxu0 0
    %2560 = vmatpush1.bf16.msra.mxu0 %v1681
    %2561 = vmatprep.subr.bf16.mxu0 0
    %2562 = vmatpush1.bf16.msra.mxu0 %v1686
    %2563 = vmatprep.subr.bf16.mxu0 0
    %2564 = vmatpush1.bf16.msra.mxu0 %v1691
    %2565 = vmatprep.subr.bf16.mxu0 0
    %2566 = vmatpush1.bf16.msra.mxu0 %v1696
    %2567 = vmatprep.subr.bf16.mxu0 0
    %2568 = vmatpush1.bf16.msra.mxu0 %v1701
    %2569 = vmatprep.subr.bf16.mxu0 0
    %2570 = vmatpush1.bf16.msra.mxu0 %v1706
    %2571 = vmatprep.subr.bf16.mxu0 0
    %2572 = vmatpush1.bf16.msra.mxu0 %v1711
    %2573 = vmatprep.subr.bf16.mxu0 0
    %2574 = vmatpush1.bf16.msra.mxu0 %v1716
    %2575 = vmatprep.subr.bf16.mxu0 0
    %2576 = vmatpush1.bf16.msra.mxu0 %v1721
    %2577 = vmatprep.subr.bf16.mxu0 0
    %2578 = vmatpush1.bf16.msra.mxu0 %v1726
    %2579 = vmatprep.subr.bf16.mxu0 0
    %2580 = vmatpush1.bf16.msra.mxu0 %v1731
    %2581 = vmatprep.subr.bf16.mxu0 0
    %2582 = vmatpush1.bf16.msra.mxu0 %v1736
    %2583 = vmatprep.subr.bf16.mxu0 0
    %2584 = vmatpush1.bf16.msra.mxu0 %v1741
    %2585 = vmatprep.subr.bf16.mxu0 0
    %2586 = vmatpush1.bf16.msra.mxu0 %v1746
    %2587 = vmatprep.mubr.bf16.mxu0 %v402
    %2588 = vmatmul.mubr.bf16.gmra.mrb[0].mxu0 %v401
    %v2589 = vpop.f32.mrb[0].mxu0
    %v2590 = vadd.f32 %v765, %v2589
    %v2591 = vpop.f32.mrb[0].mxu0
    %v2592 = vpop.f32.mrb[0].mxu0
    %v2593 = vpop.f32.mrb[0].mxu0
    %2594 = vdwg.mxu0
    %2595 = vmatprep.subr.bf16.mxu0 0
    %2596 = vmatpush1.bf16.msra.mxu0 %v1751
    %2597 = vmatprep.subr.bf16.mxu0 0
    %2598 = vmatpush1.bf16.msra.mxu0 %v1756
    %2599 = vmatprep.subr.bf16.mxu0 0
    %2600 = vmatpush1.bf16.msra.mxu0 %v1761
    %2601 = vmatprep.subr.bf16.mxu0 0
    %2602 = vmatpush1.bf16.msra.mxu0 %v1766
    %2603 = vmatprep.subr.bf16.mxu0 0
    %2604 = vmatpush1.bf16.msra.mxu0 %v1771
    %2605 = vmatprep.subr.bf16.mxu0 0
    %2606 = vmatpush1.bf16.msra.mxu0 %v1776
    %2607 = vmatprep.subr.bf16.mxu0 0
    %2608 = vmatpush1.bf16.msra.mxu0 %v1781
    %2609 = vmatprep.subr.bf16.mxu0 0
    %2610 = vmatpush1.bf16.msra.mxu0 %v1786
    %2611 = vmatprep.subr.bf16.mxu0 0
    %2612 = vmatpush1.bf16.msra.mxu0 %v1791
    %2613 = vmatprep.subr.bf16.mxu0 0
    %2614 = vmatpush1.bf16.msra.mxu0 %v1796
    %2615 = vmatprep.subr.bf16.mxu0 0
    %2616 = vmatpush1.bf16.msra.mxu0 %v1801
    %2617 = vmatprep.subr.bf16.mxu0 0
    %2618 = vmatpush1.bf16.msra.mxu0 %v1806
    %2619 = vmatprep.subr.bf16.mxu0 0
    %2620 = vmatpush1.bf16.msra.mxu0 %v1811
    %2621 = vmatprep.subr.bf16.mxu0 0
    %2622 = vmatpush1.bf16.msra.mxu0 %v1816
    %2623 = vmatprep.subr.bf16.mxu0 0
    %2624 = vmatpush1.bf16.msra.mxu0 %v1821
    %2625 = vmatprep.subr.bf16.mxu0 0
    %2626 = vmatpush1.bf16.msra.mxu0 %v1826
    %2627 = vmatprep.mubr.bf16.mxu0 %v404
    %2628 = vmatmul.mubr.bf16.gmra.mrb[0].mxu0 %v403
    %v2629 = vpop.f32.mrb[0].mxu0
    %v2630 = vadd.f32 %v2590, %v2629
    %v2631 = vpop.f32.mrb[0].mxu0
    %v2632 = vpop.f32.mrb[0].mxu0
    %v2633 = vpop.f32.mrb[0].mxu0
    %2634 = vdwg.mxu0
    %2635 = vmatprep.subr.bf16.mxu0 0
    %2636 = vmatpush1.bf16.msra.mxu0 %v1831
    %2637 = vmatprep.subr.bf16.mxu0 0
    %2638 = vmatpush1.bf16.msra.mxu0 %v1836
    %2639 = vmatprep.subr.bf16.mxu0 0
    %2640 = vmatpush1.bf16.msra.mxu0 %v1841
    %2641 = vmatprep.subr.bf16.mxu0 0
    %2642 = vmatpush1.bf16.msra.mxu0 %v1846
    %2643 = vmatprep.subr.bf16.mxu0 0
    %2644 = vmatpush1.bf16.msra.mxu0 %v1851
    %2645 = vmatprep.subr.bf16.mxu0 0
    %2646 = vmatpush1.bf16.msra.mxu0 %v1856
    %2647 = vmatprep.subr.bf16.mxu0 0
    %2648 = vmatpush1.bf16.msra.mxu0 %v1861
    %2649 = vmatprep.subr.bf16.mxu0 0
    %2650 = vmatpush1.bf16.msra.mxu0 %v1866
    %2651 = vmatprep.subr.bf16.mxu0 0
    %2652 = vmatpush1.bf16.msra.mxu0 %v1871
    %2653 = vmatprep.subr.bf16.mxu0 0
    %2654 = vmatpush1.bf16.msra.mxu0 %v1876
    %2655 = vmatprep.subr.bf16.mxu0 0
    %2656 = vmatpush1.bf16.msra.mxu0 %v1881
    %2657 = vmatprep.subr.bf16.mxu0 0
    %2658 = vmatpush1.bf16.msra.mxu0 %v1886
    %2659 = vmatprep.subr.bf16.mxu0 0
    %2660 = vmatpush1.bf16.msra.mxu0 %v1891
    %2661 = vmatprep.subr.bf16.mxu0 0
    %2662 = vmatpush1.bf16.msra.mxu0 %v1896
    %2663 = vmatprep.subr.bf16.mxu0 0
    %2664 = vmatpush1.bf16.msra.mxu0 %v1901
    %2665 = vmatprep.subr.bf16.mxu0 0
    %2666 = vmatpush1.bf16.msra.mxu0 %v1906
    %2667 = vmatprep.mubr.bf16.mxu0 %v406
    %2668 = vmatmul.mubr.bf16.gmra.mrb[0].mxu0 %v405
    %v2669 = vpop.f32.mrb[0].mxu0
    %v2670 = vadd.f32 %v2630, %v2669
    %v2671 = vpop.f32.mrb[0].mxu0
    %v2672 = vpop.f32.mrb[0].mxu0
    %v2673 = vpop.f32.mrb[0].mxu0
    %2674 = vdwg.mxu0
    %2675 = vmatprep.subr.bf16.mxu0 0
    %2676 = vmatpush1.bf16.msra.mxu0 %v1911
    %2677 = vmatprep.subr.bf16.mxu0 0
    %2678 = vmatpush1.bf16.msra.mxu0 %v1916
    %2679 = vmatprep.subr.bf16.mxu0 0
    %2680 = vmatpush1.bf16.msra.mxu0 %v1921
    %2681 = vmatprep.subr.bf16.mxu0 0
    %2682 = vmatpush1.bf16.msra.mxu0 %v1926
    %2683 = vmatprep.subr.bf16.mxu0 0
    %2684 = vmatpush1.bf16.msra.mxu0 %v1931
    %2685 = vmatprep.subr.bf16.mxu0 0
    %2686 = vmatpush1.bf16.msra.mxu0 %v1936
    %2687 = vmatprep.subr.bf16.mxu0 0
    %2688 = vmatpush1.bf16.msra.mxu0 %v1941
    %2689 = vmatprep.subr.bf16.mxu0 0
    %2690 = vmatpush1.bf16.msra.mxu0 %v1946
    %2691 = vmatprep.subr.bf16.mxu0 0
    %2692 = vmatpush1.bf16.msra.mxu0 0
    %2693 = vmatprep.subr.bf16.mxu0 0
    %2694 = vmatpush1.bf16.msra.mxu0 0
    %2695 = vmatprep.subr.bf16.mxu0 0
    %2696 = vmatpush1.bf16.msra.mxu0 0
    %2697 = vmatprep.subr.bf16.mxu0 0
    %2698 = vmatpush1.bf16.msra.mxu0 0
    %2699 = vmatprep.subr.bf16.mxu0 0
    %2700 = vmatpush1.bf16.msra.mxu0 0
    %2701 = vmatprep.subr.bf16.mxu0 0
    %2702 = vmatpush1.bf16.msra.mxu0 0
    %2703 = vmatprep.subr.bf16.mxu0 0
    %2704 = vmatpush1.bf16.msra.mxu0 0
    %2705 = vmatprep.subr.bf16.mxu0 0
    %2706 = vmatpush1.bf16.msra.mxu0 0
    %2707 = vmatprep.mubr.bf16.mxu0 0
    %2708 = vmatmul.mubr.bf16.gmra.mrb[0].mxu0 %v407
    %v2709 = vpop.f32.mrb[0].mxu0
    %v2710 = vadd.f32 %v2670, %v2709
    %v2711 = vpop.f32.mrb[0].mxu0
    %v2712 = vpop.f32.mrb[0].mxu0
    %v2713 = vpop.f32.mrb[0].mxu0
    %2714 = vdwg.mxu0
    %v2715 = vmax.f32 %v2385, 0.0
    %v2716 = vmax.f32 %v2387, 0.0
    %v2717 = vmax.f32 %v2549, 0.0
    %v2718 = vmax.f32 %v2551, 0.0
    %v2719 = vmax.f32 %v2710, 0.0
    %v2720 = vpack.c.bf16 %v2715, %v2715
    %v2721 = vpack.c.bf16 %v2716, %v2716
    %v2722 = vpack.c.bf16 %v2717, %v2717
    %v2723 = vpack.c.bf16 %v2718, %v2718
    %v2724 = vpack.c.bf16 %v2719, %v2719
    %v2725 = vld [vmem:[%s5] sm:$0xf]
    %v2726 = vld [vmem:[%s5 + $0x4] sm:$0xf]
    %v2727 = vld [vmem:[%s5 + $0x8] sm:$0xf]
    %v2728 = vld [vmem:[%s5 + $0xc] sm:$0xf]
    %v2729 = vld [vmem:[%s5 + $0x10] sm:$0xf]
    %v2730 = vld [vmem:[%s5 + $0x14] sm:$0xf]
    %v2731 = vld [vmem:[%s5 + $0x18] sm:$0xf]
    %v2732 = vld [vmem:[%s5 + $0x1c] sm:$0xf]
    %v2733 = vld [vmem:[%s5 + $0x20] sm:$0xf]
    %v2734 = vld [vmem:[%s5 + $0x24] sm:$0xf]
    %v2735 = vld [vmem:[%s5 + $0x28] sm:$0xf]
    %v2736 = vld [vmem:[%s5 + $0x2c] sm:$0xf]
    %v2737 = vld [vmem:[%s5 + $0x30] sm:$0xf]
    %v2738 = vld [vmem:[%s5 + $0x34] sm:$0xf]
    %v2739 = vld [vmem:[%s5 + $0x38] sm:$0xf]
    %v2740 = vld [vmem:[%s5 + $0x3c] sm:$0xf]
    %v2741 = vld [vmem:[%s5 + $0x40] sm:$0xf]
    %v2742 = vld [vmem:[%s5 + $0x44] sm:$0xf]
    %v2743 = vld [vmem:[%s5 + $0x48] sm:$0xf]
    %v2744 = vld [vmem:[%s5 + $0x4c] sm:$0xf]
    %v2745 = vld [vmem:[%s5 + $0x50] sm:$0xf]
    %v2746 = vld [vmem:[%s5 + $0x54] sm:$0xf]
    %v2747 = vld [vmem:[%s5 + $0x58] sm:$0xf]
    %v2748 = vld [vmem:[%s5 + $0x5c] sm:$0xf]
    %v2749 = vld [vmem:[%s5 + $0x60] sm:$0xf]
    %v2750 = vld [vmem:[%s5 + $0x64] sm:$0xf]
    %v2751 = vld [vmem:[%s5 + $0x68] sm:$0xf]
    %v2752 = vld [vmem:[%s5 + $0x6c] sm:$0xf]
    %v2753 = vld [vmem:[%s5 + $0x70] sm:$0xf]
    %v2754 = vld [vmem:[%s5 + $0x74] sm:$0xf]
    %v2755 = vld [vmem:[%s5 + $0x78] sm:$0xf]
    %v2756 = vld [vmem:[%s5 + $0x7c] sm:$0xf]
    %v2757 = vld [vmem:[%s5 + $0x80] sm:$0xf]
    %v2758 = vld [vmem:[%s5 + $0x84] sm:$0xf]
    %v2759 = vld [vmem:[%s5 + $0x88] sm:$0xf]
    %v2760 = vld [vmem:[%s5 + $0x8c] sm:$0xf]
    %v2761 = vld [vmem:[%s5 + $0x90] sm:$0xf]
    %v2762 = vld [vmem:[%s5 + $0x94] sm:$0xf]
    %v2763 = vld [vmem:[%s5 + $0x98] sm:$0xf]
    %v2764 = vld [vmem:[%s5 + $0x9c] sm:$0xf]
    %v2765 = vld [vmem:[%s5 + $0xa0] sm:$0xf]
    %v2766 = vld [vmem:[%s5 + $0xa4] sm:$0xf]
    %v2767 = vld [vmem:[%s5 + $0xa8] sm:$0xf]
    %v2768 = vld [vmem:[%s5 + $0xac] sm:$0xf]
    %v2769 = vld [vmem:[%s5 + $0xb0] sm:$0xf]
    %v2770 = vld [vmem:[%s5 + $0xb4] sm:$0xf]
    %v2771 = vld [vmem:[%s5 + $0xb8] sm:$0xf]
    %v2772 = vld [vmem:[%s5 + $0xbc] sm:$0xf]
    %v2773 = vld [vmem:[%s5 + $0xc0] sm:$0xf]
    %v2774 = vld [vmem:[%s5 + $0xc4] sm:$0xf]
    %v2775 = vld [vmem:[%s5 + $0xc8] sm:$0xf]
    %v2776 = vld [vmem:[%s5 + $0xcc] sm:$0xf]
    %v2777 = vld [vmem:[%s5 + $0xd0] sm:$0xf]
    %v2778 = vld [vmem:[%s5 + $0xd4] sm:$0xf]
    %v2779 = vld [vmem:[%s5 + $0xd8] sm:$0xf]
    %v2780 = vld [vmem:[%s5 + $0xdc] sm:$0xf]
    %v2781 = vld [vmem:[%s5 + $0xe0] sm:$0xf]
    %v2782 = vld [vmem:[%s5 + $0xe4] sm:$0xf]
    %v2783 = vld [vmem:[%s5 + $0xe8] sm:$0xf]
    %v2784 = vld [vmem:[%s5 + $0xec] sm:$0xf]
    %v2785 = vld [vmem:[%s5 + $0xf0] sm:$0xf]
    %v2786 = vld [vmem:[%s5 + $0xf4] sm:$0xf]
    %v2787 = vld [vmem:[%s5 + $0xf8] sm:$0xf]
    %v2788 = vld [vmem:[%s5 + $0xfc] sm:$0xf]
    %v2789 = vld [vmem:[%s5 + $0x100] sm:$0xf]
    %v2790 = vld [vmem:[%s5 + $0x104] sm:$0xf]
    %v2791 = vld [vmem:[%s5 + $0x108] sm:$0xf]
    %v2792 = vld [vmem:[%s5 + $0x10c] sm:$0xf]
    %v2793 = vld [vmem:[%s5 + $0x110] sm:$0xf]
    %v2794 = vld [vmem:[%s5 + $0x114] sm:$0xf]
    %v2795 = vld [vmem:[%s5 + $0x118] sm:$0xf]
    %v2796 = vld [vmem:[%s5 + $0x11c] sm:$0xf]
    %v2797 = vld [vmem:[%s5 + $0x120] sm:$0xf]
    %v2798 = vld [vmem:[%s5 + $0x124] sm:$0xf]
    %v2799 = vld [vmem:[%s5 + $0x128] sm:$0xf]
    %v2800 = vld [vmem:[%s5 + $0x12c] sm:$0xf]
    %v2801 = vld [vmem:[%s5 + $0x130] sm:$0xf]
    %v2802 = vld [vmem:[%s5 + $0x134] sm:$0xf]
    %v2803 = vld [vmem:[%s5 + $0x138] sm:$0xf]
    %v2804 = vld [vmem:[%s5 + $0x13c] sm:$0xf]
    %v2805 = vld [vmem:[#allocation10] sm:$0x1]
    %v2807 = vlaneseq
    %v2808 = vshrl.u32 %v2807, 7
    %v2809 = vsub.s32 0, %v2808
    %v2810 = vrot.slane %v2805, %v2809
    %v2892 = vunpack.c.l.b16 %v2725
    %v2893 = vunpack.c.l.b16 %v2726
    %v2894 = vunpack.c.l.b16 %v2727
    %v2895 = vunpack.c.l.b16 %v2728
    %v2896 = vunpack.c.l.b16 %v2729
    %v2897 = vunpack.c.l.b16 %v2730
    %v2898 = vunpack.c.l.b16 %v2731
    %v2899 = vunpack.c.l.b16 %v2732
    %v2900 = vunpack.c.l.b16 %v2733
    %v2901 = vunpack.c.l.b16 %v2734
    %v2902 = vunpack.c.l.b16 %v2735
    %v2903 = vunpack.c.l.b16 %v2736
    %v2904 = vunpack.c.l.b16 %v2737
    %v2905 = vunpack.c.l.b16 %v2738
    %v2906 = vunpack.c.l.b16 %v2739
    %v2907 = vunpack.c.l.b16 %v2740
    %v2908 = vunpack.c.l.b16 %v2741
    %v2909 = vunpack.c.l.b16 %v2742
    %v2910 = vunpack.c.l.b16 %v2743
    %v2911 = vunpack.c.l.b16 %v2744
    %v2912 = vunpack.c.l.b16 %v2745
    %v2913 = vunpack.c.l.b16 %v2746
    %v2914 = vunpack.c.l.b16 %v2747
    %v2915 = vunpack.c.l.b16 %v2748
    %v2916 = vunpack.c.l.b16 %v2749
    %v2917 = vunpack.c.l.b16 %v2750
    %v2918 = vunpack.c.l.b16 %v2751
    %v2919 = vunpack.c.l.b16 %v2752
    %v2920 = vunpack.c.l.b16 %v2753
    %v2921 = vunpack.c.l.b16 %v2754
    %v2922 = vunpack.c.l.b16 %v2755
    %v2923 = vunpack.c.l.b16 %v2756
    %v2924 = vunpack.c.l.b16 %v2757
    %v2925 = vunpack.c.l.b16 %v2758
    %v2926 = vunpack.c.l.b16 %v2759
    %v2927 = vunpack.c.l.b16 %v2760
    %v2928 = vunpack.c.l.b16 %v2761
    %v2929 = vunpack.c.l.b16 %v2762
    %v2930 = vunpack.c.l.b16 %v2763
    %v2931 = vunpack.c.l.b16 %v2764
    %v2932 = vunpack.c.l.b16 %v2765
    %v2933 = vunpack.c.l.b16 %v2766
    %v2934 = vunpack.c.l.b16 %v2767
    %v2935 = vunpack.c.l.b16 %v2768
    %v2936 = vunpack.c.l.b16 %v2769
    %v2937 = vunpack.c.l.b16 %v2770
    %v2938 = vunpack.c.l.b16 %v2771
    %v2939 = vunpack.c.l.b16 %v2772
    %v2940 = vunpack.c.l.b16 %v2773
    %v2941 = vunpack.c.l.b16 %v2774
    %v2942 = vunpack.c.l.b16 %v2775
    %v2943 = vunpack.c.l.b16 %v2776
    %v2944 = vunpack.c.l.b16 %v2777
    %v2945 = vunpack.c.l.b16 %v2778
    %v2946 = vunpack.c.l.b16 %v2779
    %v2947 = vunpack.c.l.b16 %v2780
    %v2948 = vunpack.c.l.b16 %v2781
    %v2949 = vunpack.c.l.b16 %v2782
    %v2950 = vunpack.c.l.b16 %v2783
    %v2951 = vunpack.c.l.b16 %v2784
    %v2952 = vunpack.c.l.b16 %v2785
    %v2953 = vunpack.c.l.b16 %v2786
    %v2954 = vunpack.c.l.b16 %v2787
    %v2955 = vunpack.c.l.b16 %v2788
    %v2956 = vunpack.c.l.b16 %v2789
    %v2957 = vunpack.c.l.b16 %v2790
    %v2958 = vunpack.c.l.b16 %v2791
    %v2959 = vunpack.c.l.b16 %v2792
    %v2960 = vunpack.c.l.b16 %v2793
    %v2961 = vunpack.c.l.b16 %v2794
    %v2962 = vunpack.c.l.b16 %v2795
    %v2963 = vunpack.c.l.b16 %v2796
    %v2964 = vunpack.c.l.b16 %v2797
    %v2965 = vunpack.c.l.b16 %v2798
    %v2966 = vunpack.c.l.b16 %v2799
    %v2967 = vunpack.c.l.b16 %v2800
    %v2968 = vunpack.c.l.b16 %v2801
    %v2969 = vunpack.c.l.b16 %v2802
    %v2970 = vunpack.c.l.b16 %v2803
    %v2971 = vunpack.c.l.b16 %v2804
    %v2972 = vpack.c.b16 %v2893, %v2892
    %v2973 = vpack.c.b16 %v2895, %v2894
    %v2974 = vpack.c.b16 %v2897, %v2896
    %v2975 = vpack.c.b16 %v2899, %v2898
    %v2976 = vpack.c.b16 %v2901, %v2900
    %v2977 = vpack.c.b16 %v2903, %v2902
    %v2978 = vpack.c.b16 %v2905, %v2904
    %v2979 = vpack.c.b16 %v2907, %v2906
    %v2980 = vpack.c.b16 %v2909, %v2908
    %v2981 = vpack.c.b16 %v2911, %v2910
    %v2982 = vpack.c.b16 %v2913, %v2912
    %v2983 = vpack.c.b16 %v2915, %v2914
    %v2984 = vpack.c.b16 %v2917, %v2916
    %v2985 = vpack.c.b16 %v2919, %v2918
    %v2986 = vpack.c.b16 %v2921, %v2920
    %v2987 = vpack.c.b16 %v2923, %v2922
    %v2988 = vpack.c.b16 %v2925, %v2924
    %v2989 = vpack.c.b16 %v2927, %v2926
    %v2990 = vpack.c.b16 %v2929, %v2928
    %v2991 = vpack.c.b16 %v2931, %v2930
    %v2992 = vpack.c.b16 %v2933, %v2932
    %v2993 = vpack.c.b16 %v2935, %v2934
    %v2994 = vpack.c.b16 %v2937, %v2936
    %v2995 = vpack.c.b16 %v2939, %v2938
    %v2996 = vpack.c.b16 %v2941, %v2940
    %v2997 = vpack.c.b16 %v2943, %v2942
    %v2998 = vpack.c.b16 %v2945, %v2944
    %v2999 = vpack.c.b16 %v2947, %v2946
    %v3000 = vpack.c.b16 %v2949, %v2948
    %v3001 = vpack.c.b16 %v2951, %v2950
    %v3002 = vpack.c.b16 %v2953, %v2952
    %v3003 = vpack.c.b16 %v2955, %v2954
    %v3004 = vpack.c.b16 %v2957, %v2956
    %v3005 = vpack.c.b16 %v2959, %v2958
    %v3006 = vpack.c.b16 %v2961, %v2960
    %v3007 = vpack.c.b16 %v2963, %v2962
    %v3008 = vpack.c.b16 %v2965, %v2964
    %v3009 = vpack.c.b16 %v2967, %v2966
    %v3010 = vpack.c.b16 %v2969, %v2968
    %v3011 = vpack.c.b16 %v2971, %v2970
    %3052 = vmatprep.subr.bf16.mxu0 0
    %3053 = vmatpush1.bf16.msra.mxu0 %v2972
    %3054 = vmatprep.subr.bf16.mxu0 0
    %3055 = vmatpush1.bf16.msra.mxu0 %v2973
    %3056 = vmatprep.subr.bf16.mxu0 0
    %3057 = vmatpush1.bf16.msra.mxu0 %v2974
    %3058 = vmatprep.subr.bf16.mxu0 0
    %3059 = vmatpush1.bf16.msra.mxu0 %v2975
    %3060 = vmatprep.subr.bf16.mxu0 0
    %3061 = vmatpush1.bf16.msra.mxu0 %v2976
    %3062 = vmatprep.subr.bf16.mxu0 0
    %3063 = vmatpush1.bf16.msra.mxu0 %v2977
    %3064 = vmatprep.subr.bf16.mxu0 0
    %3065 = vmatpush1.bf16.msra.mxu0 %v2978
    %3066 = vmatprep.subr.bf16.mxu0 0
    %3067 = vmatpush1.bf16.msra.mxu0 %v2979
    %3068 = vmatprep.subr.bf16.mxu0 0
    %3069 = vmatpush1.bf16.msra.mxu0 %v2980
    %3070 = vmatprep.subr.bf16.mxu0 0
    %3071 = vmatpush1.bf16.msra.mxu0 %v2981
    %3072 = vmatprep.subr.bf16.mxu0 0
    %3073 = vmatpush1.bf16.msra.mxu0 %v2982
    %3074 = vmatprep.subr.bf16.mxu0 0
    %3075 = vmatpush1.bf16.msra.mxu0 %v2983
    %3076 = vmatprep.subr.bf16.mxu0 0
    %3077 = vmatpush1.bf16.msra.mxu0 %v2984
    %3078 = vmatprep.subr.bf16.mxu0 0
    %3079 = vmatpush1.bf16.msra.mxu0 %v2985
    %3080 = vmatprep.subr.bf16.mxu0 0
    %3081 = vmatpush1.bf16.msra.mxu0 %v2986
    %3082 = vmatprep.subr.bf16.mxu0 0
    %3083 = vmatpush1.bf16.msra.mxu0 %v2987
    %3084 = vmatprep.mubr.bf16.mxu0 %v2721
    %3085 = vmatmul.mubr.bf16.gmra.mrb[0].mxu0 %v2720
    %v3086 = vpop.f32.mrb[0].mxu0
    %v3087 = vadd.f32 %v2810, %v3086
    %v3088 = vpop.f32.mrb[0].mxu0
    %v3089 = vpop.f32.mrb[0].mxu0
    %v3090 = vpop.f32.mrb[0].mxu0
    %3091 = vdwg.mxu0
    %3092 = vmatprep.subr.bf16.mxu0 0
    %3093 = vmatpush1.bf16.msra.mxu0 %v2988
    %3094 = vmatprep.subr.bf16.mxu0 0
    %3095 = vmatpush1.bf16.msra.mxu0 %v2989
    %3096 = vmatprep.subr.bf16.mxu0 0
    %3097 = vmatpush1.bf16.msra.mxu0 %v2990
    %3098 = vmatprep.subr.bf16.mxu0 0
    %3099 = vmatpush1.bf16.msra.mxu0 %v2991
    %3100 = vmatprep.subr.bf16.mxu0 0
    %3101 = vmatpush1.bf16.msra.mxu0 %v2992
    %3102 = vmatprep.subr.bf16.mxu0 0
    %3103 = vmatpush1.bf16.msra.mxu0 %v2993
    %3104 = vmatprep.subr.bf16.mxu0 0
    %3105 = vmatpush1.bf16.msra.mxu0 %v2994
    %3106 = vmatprep.subr.bf16.mxu0 0
    %3107 = vmatpush1.bf16.msra.mxu0 %v2995
    %3108 = vmatprep.subr.bf16.mxu0 0
    %3109 = vmatpush1.bf16.msra.mxu0 %v2996
    %3110 = vmatprep.subr.bf16.mxu0 0
    %3111 = vmatpush1.bf16.msra.mxu0 %v2997
    %3112 = vmatprep.subr.bf16.mxu0 0
    %3113 = vmatpush1.bf16.msra.mxu0 %v2998
    %3114 = vmatprep.subr.bf16.mxu0 0
    %3115 = vmatpush1.bf16.msra.mxu0 %v2999
    %3116 = vmatprep.subr.bf16.mxu0 0
    %3117 = vmatpush1.bf16.msra.mxu0 %v3000
    %3118 = vmatprep.subr.bf16.mxu0 0
    %3119 = vmatpush1.bf16.msra.mxu0 %v3001
    %3120 = vmatprep.subr.bf16.mxu0 0
    %3121 = vmatpush1.bf16.msra.mxu0 %v3002
    %3122 = vmatprep.subr.bf16.mxu0 0
    %3123 = vmatpush1.bf16.msra.mxu0 %v3003
    %3124 = vmatprep.mubr.bf16.mxu0 %v2723
    %3125 = vmatmul.mubr.bf16.gmra.mrb[0].mxu0 %v2722
    %v3126 = vpop.f32.mrb[0].mxu0
    %v3127 = vadd.f32 %v3087, %v3126
    %v3128 = vpop.f32.mrb[0].mxu0
    %v3129 = vpop.f32.mrb[0].mxu0
    %v3130 = vpop.f32.mrb[0].mxu0
    %3131 = vdwg.mxu0
    %3132 = vmatprep.subr.bf16.mxu0 0
    %3133 = vmatpush1.bf16.msra.mxu0 %v3004
    %3134 = vmatprep.subr.bf16.mxu0 0
    %3135 = vmatpush1.bf16.msra.mxu0 %v3005
    %3136 = vmatprep.subr.bf16.mxu0 0
    %3137 = vmatpush1.bf16.msra.mxu0 %v3006
    %3138 = vmatprep.subr.bf16.mxu0 0
    %3139 = vmatpush1.bf16.msra.mxu0 %v3007
    %3140 = vmatprep.subr.bf16.mxu0 0
    %3141 = vmatpush1.bf16.msra.mxu0 %v3008
    %3142 = vmatprep.subr.bf16.mxu0 0
    %3143 = vmatpush1.bf16.msra.mxu0 %v3009
    %3144 = vmatprep.subr.bf16.mxu0 0
    %3145 = vmatpush1.bf16.msra.mxu0 %v3010
    %3146 = vmatprep.subr.bf16.mxu0 0
    %3147 = vmatpush1.bf16.msra.mxu0 %v3011
    %3148 = vmatprep.subr.bf16.mxu0 0
    %3149 = vmatpush1.bf16.msra.mxu0 0
    %3150 = vmatprep.subr.bf16.mxu0 0
    %3151 = vmatpush1.bf16.msra.mxu0 0
    %3152 = vmatprep.subr.bf16.mxu0 0
    %3153 = vmatpush1.bf16.msra.mxu0 0
    %3154 = vmatprep.subr.bf16.mxu0 0
    %3155 = vmatpush1.bf16.msra.mxu0 0
    %3156 = vmatprep.subr.bf16.mxu0 0
    %3157 = vmatpush1.bf16.msra.mxu0 0
    %3158 = vmatprep.subr.bf16.mxu0 0
    %3159 = vmatpush1.bf16.msra.mxu0 0
    %3160 = vmatprep.subr.bf16.mxu0 0
    %3161 = vmatpush1.bf16.msra.mxu0 0
    %3162 = vmatprep.subr.bf16.mxu0 0
    %3163 = vmatpush1.bf16.msra.mxu0 0
    %3164 = vmatprep.mubr.bf16.mxu0 0
    %3165 = vmatmul.mubr.bf16.gmra.mrb[0].mxu0 %v2724
    %v3166 = vpop.f32.mrb[0].mxu0
    %v3167 = vadd.f32 %v3127, %v3166
    %v3168 = vpop.f32.mrb[0].mxu0
    %v3169 = vpop.f32.mrb[0].mxu0
    %v3170 = vpop.f32.mrb[0].mxu0
    %3171 = vdwg.mxu0
    %v3172 = vtanh.pop %v3167
    %vm3173 = vcmask 31744
    %3174 = vst.msk [vmem:[%s7] sm:$0xff] %vm3173, %v3172
    // Predicated region
    $region54: #{tpu_custom_call.1} parent=1 // pred_check
      _
    $region55: #{tpu_custom_call.1} parent=1 // pred_check_branch
      %3176 = sbr.rel (0) target = $region57
    $region56: #{tpu_custom_call.1} parent=1 // pred_region
      _
    $region57: #{tpu_custom_call.1} parent=1 // pred_fallthru
      _
    // Predicated region
    $region58: #{tpu_custom_call.1} parent=1 // pred_check
      _
    $region59: #{tpu_custom_call.1} parent=1 // pred_check_branch
      %3178 = sbr.rel (0) target = $region61
    $region60: #{tpu_custom_call.1} parent=1 // pred_region
      _
    $region61: #{tpu_custom_call.1} parent=1 // pred_fallthru
      _
    %3179 = vsyncpa [#allocation3], 1
    %3180 = vsyncpa [#allocation5], 1
    %3181 = vsyncpa [#allocation8], 1
    %3182 = vsyncpa [#allocation11], 1

</llo_original>
